<compile_context>
chip_gen: v7x
topology: tpu7x:2x2x1
jax: 0.10.0
libtpu: 0.0.40
codegen_flags: <defaults>
</compile_context>

<pallas_src>
import functools

import jax
import jax.numpy as jnp
from jax.experimental import pallas as pl
from jax.experimental.pallas import tpu as pltpu

EPS = 1e-5     # nn.BatchNorm2d default eps
LANE = 128     # TPU lane width


def _round_up(x, m):
    return (x + m - 1) // m * m


# ----------------------------- Pallas kernels ------------------------------

def conv_bn_stats_kernel(x_ref, w_ref, scale_ref, shift_ref,   # inputs
                         y_ref, stats_ref,                     # outputs
                         pad_ref,                              # VMEM scratch
                         *, pool, affine, Hp, Wp):
    """(optional 2x2 maxpool | optional prev-layer folded BN+ReLU) -> 3x3 SAME conv.

    x_ref:     (1, Hin, Win, Cp)    one batch image, channels padded to 128
    w_ref:     (9*Cp, Coutp)        3x3 taps flattened into the contraction dim
    scale_ref: (1, Cp)              folded BN scale of the *previous* layer
    shift_ref: (1, Cp)              folded BN shift of the *previous* layer
    y_ref:     (1, Hp, Wp, Coutp)   raw conv output (pre-BN)
    stats_ref: (1, 8, Coutp)        row0 = per-channel sum, row1 = sum of squares
    pad_ref:   (1, Hp+2, Wp+2, Cp)  spatially zero-padded activation tile
    """
    Cp = x_ref.shape[-1]
    Coutp = y_ref.shape[-1]

    if pool:
        # fused MaxPool2d(2): (2Hp, 2Wp, Cp) -> (Hp, Wp, Cp); lane dim untouched
        x = x_ref[0]                                     # (2Hp, 2Wp, Cp)
        x = x.reshape(2 * Hp, Wp, 2, Cp)
        x = jnp.maximum(x[:, :, 0, :], x[:, :, 1, :])    # (2Hp, Wp, Cp)
        x = x.reshape(Hp, 2, Wp, Cp)
        t = jnp.maximum(x[:, 0, :, :], x[:, 1, :, :])    # (Hp, Wp, Cp)
    else:
        t = x_ref[0]                                     # (Hp, Wp, Cp)

    if affine:
        # previous layer's BatchNorm (folded scale/shift) + ReLU, applied on load
        t = jnp.maximum(t * scale_ref[...] + shift_ref[...], 0.0)

    # SAME zero padding built in VMEM -- no padded copy through HBM
    pad_ref[...] = jnp.zeros_like(pad_ref)
    pad_ref[0, 1:Hp + 1, 1:Wp + 1, :] = t
    padv = pad_ref[0]                                    # (Hp+2, Wp+2, Cp)

    # im2col in registers: 9 shifted views -> ONE lane-dense MXU matmul (K = 9*Cp)
    M = Hp * Wp
    cols = [padv[dy:dy + Hp, dx:dx + Wp, :].reshape(M, Cp)
            for dy in range(3) for dx in range(3)]
    patches = jnp.concatenate(cols, axis=-1)             # (M, 9*Cp)
    acc = jnp.dot(patches, w_ref[...],
                  preferred_element_type=jnp.float32)    # (M, Coutp)

    y_ref[...] = acc.reshape(1, Hp, Wp, Coutp)

    # one-pass per-image partial BatchNorm statistics (sum, sum of squares)
    s = jnp.sum(acc, axis=0, keepdims=True)              # (1, Coutp)
    ss = jnp.sum(acc * acc, axis=0, keepdims=True)       # (1, Coutp)
    row = jax.lax.broadcasted_iota(jnp.int32, (8, Coutp), 0)
    st = jnp.where(row == 0, s, jnp.where(row == 1, ss, 0.0))
    stats_ref[...] = st[None]                            # (1, 8, Coutp)


def bn_relu_kernel(y_ref, scale_ref, shift_ref, o_ref):
    # final BatchNorm (folded scale/shift) + ReLU; all blocks lane-dense (128)
    o_ref[...] = jnp.maximum(y_ref[...] * scale_ref[...] + shift_ref[...], 0.0)


# ------------------------------ JAX wrappers --------------------------------

def _compiler_params():
    return pltpu.CompilerParams(
        dimension_semantics=("parallel",),        # batch axis shards across TCs
        vmem_limit_bytes=32 * 1024 * 1024,
    )


def _conv_layer(x, w, scale, shift, *, pool, affine, Hp, Wp, Coutp):
    """Fused (pool | bn+relu) -> conv3x3; returns raw conv output + partial stats."""
    N, Hin, Win, Cp = x.shape
    kernel = functools.partial(conv_bn_stats_kernel,
                               pool=pool, affine=affine, Hp=Hp, Wp=Wp)
    y, stats = pl.pallas_call(
        kernel,
        out_shape=(jax.ShapeDtypeStruct((N, Hp, Wp, Coutp), jnp.float32),
                   jax.ShapeDtypeStruct((N, 8, Coutp), jnp.float32)),
        grid_spec=pltpu.PrefetchScalarGridSpec(
            num_scalar_prefetch=0,
            grid=(N,),
            in_specs=[
                pl.BlockSpec((1, Hin, Win, Cp), lambda n: (n, 0, 0, 0)),
                pl.BlockSpec((9 * Cp, Coutp), lambda n: (0, 0)),
                pl.BlockSpec((1, Cp), lambda n: (0, 0)),
                pl.BlockSpec((1, Cp), lambda n: (0, 0)),
            ],
            out_specs=[
                pl.BlockSpec((1, Hp, Wp, Coutp), lambda n: (n, 0, 0, 0)),
                pl.BlockSpec((1, 8, Coutp), lambda n: (n, 0, 0)),
            ],
            scratch_shapes=[pltpu.VMEM((1, Hp + 2, Wp + 2, Cp), jnp.float32)],
        ),
        compiler_params=_compiler_params(),
    )(x, w, scale, shift)
    return y, stats


def _bn_relu(y, scale, shift):
    N, Hp, Wp, Cp = y.shape
    return pl.pallas_call(
        bn_relu_kernel,
        out_shape=jax.ShapeDtypeStruct((N, Hp, Wp, Cp), jnp.float32),
        grid_spec=pltpu.PrefetchScalarGridSpec(
            num_scalar_prefetch=0,
            grid=(N,),
            in_specs=[
                pl.BlockSpec((1, Hp, Wp, Cp), lambda n: (n, 0, 0, 0)),
                pl.BlockSpec((1, Cp), lambda n: (0, 0)),
                pl.BlockSpec((1, Cp), lambda n: (0, 0)),
            ],
            out_specs=pl.BlockSpec((1, Hp, Wp, Cp), lambda n: (n, 0, 0, 0)),
        ),
        compiler_params=_compiler_params(),
    )(y, scale, shift)


def _bn_scale_shift(stats, gamma_p, beta_p, count):
    """Phase 2 of two-phase BN: combine per-image (sum, sumsq) into scale/shift.

    Tiny [C]-sized math -> plain-JAX glue."""
    s = jnp.sum(stats[:, 0, :], axis=0)
    ss = jnp.sum(stats[:, 1, :], axis=0)
    mean = s / count
    var = ss / count - mean * mean              # biased (training-mode) variance
    scale = gamma_p * jax.lax.rsqrt(var + EPS)
    shift = beta_p - mean * scale
    return scale.reshape(1, -1), shift.reshape(1, -1)


def _prep_w(w_hwio, cin_p, cout_p):
    kh, kw, cin, cout = w_hwio.shape
    w = jnp.pad(w_hwio, ((0, 0), (0, 0), (0, cin_p - cin), (0, cout_p - cout)))
    return w.reshape(kh * kw * cin_p, cout_p).astype(jnp.float32)


def _pad_vec(v, cp):
    return jnp.pad(v, (0, cp - v.shape[0])).astype(jnp.float32)


def down_forward(x_nchw, params):
    """Pallas implementation of down(in_ch, out_ch).forward(x), x in NCHW.

    Note: conv biases (params['b1'], params['b2']) are intentionally unused --
    training-mode BatchNorm subtracts the per-channel mean, which cancels a
    constant per-channel bias exactly."""
    N, Cin, H, W = x_nchw.shape
    Cout = params["w1"].shape[-1]
    Hp, Wp = H // 2, W // 2
    Cinp = _round_up(Cin, LANE)
    Coutp = _round_up(Cout, LANE)

    # NCHW -> NHWC, channels padded to the 128-lane width (layout glue)
    x = jnp.transpose(x_nchw, (0, 2, 3, 1)).astype(jnp.float32)
    x = jnp.pad(x, ((0, 0), (0, 0), (0, 0), (0, Cinp - Cin)))

    w1 = _prep_w(params["w1"], Cinp, Coutp)
    w2 = _prep_w(params["w2"], Coutp, Coutp)
    g1, be1 = _pad_vec(params["g1"], Coutp), _pad_vec(params["be1"], Coutp)
    g2, be2 = _pad_vec(params["g2"], Coutp), _pad_vec(params["be2"], Coutp)

    count = N * Hp * Wp
    one = jnp.ones((1, Cinp), jnp.float32)
    zero = jnp.zeros((1, Cinp), jnp.float32)

    # layer 1: fused maxpool(2x2) + conv3x3 (raw output) + partial BN stats
    y1, st1 = _conv_layer(x, w1, one, zero, pool=True, affine=False,
                          Hp=Hp, Wp=Wp, Coutp=Coutp)
    sc1, sh1 = _bn_scale_shift(st1, g1, be1, count)

    # layer 2: fused BN1+ReLU + conv3x3 (raw output) + partial BN stats
    y2, st2 = _conv_layer(y1, w2, sc1, sh1, pool=False, affine=True,
                          Hp=Hp, Wp=Wp, Coutp=Coutp)
    sc2, sh2 = _bn_scale_shift(st2, g2, be2, count)

    # final BN2 + ReLU
    out = _bn_relu(y2, sc2, sh2)

    out = out[..., :Cout]                      # drop channel padding
    return jnp.transpose(out, (0, 3, 1, 2))    # NHWC -> NCHW


# ------------------------- pure-JAX reference (check) ------------------------

def ref_forward(x_nchw, params):
    x = jnp.transpose(x_nchw, (0, 2, 3, 1))
    x = jax.lax.reduce_window(x, -jnp.inf, jax.lax.max,
                              (1, 2, 2, 1), (1, 2, 2, 1), "VALID")

    def cbr(x, w, b, g, be):
        y = jax.lax.conv_general_dilated(
            x, w, (1, 1), "SAME",
            dimension_numbers=("NHWC", "HWIO", "NHWC")) + b
        mean = jnp.mean(y, axis=(0, 1, 2), keepdims=True)
        var = jnp.mean((y - mean) ** 2, axis=(0, 1, 2), keepdims=True)
        y = (y - mean) * jax.lax.rsqrt(var + EPS) * g + be
        return jnp.maximum(y, 0.0)

    x = cbr(x, params["w1"], params["b1"], params["g1"], params["be1"])
    x = cbr(x, params["w2"], params["b2"], params["g2"], params["be2"])
    return jnp.transpose(x, (0, 3, 1, 2))


# ----------------------------------- main ------------------------------------

if __name__ == "__main__":
    key = jax.random.PRNGKey(0)
    N, in_ch, out_ch, H, W = 2, 4, 8, 16, 16

    k = jax.random.split(key, 9)
    params = {
        # conv weights stored HWIO (PyTorch OIHW weight would be transposed to this)
        "w1": 0.1 * jax.random.normal(k[0], (3, 3, in_ch, out_ch), jnp.float32),
        "b1": 0.1 * jax.random.normal(k[1], (out_ch,), jnp.float32),
        "g1": 1.0 + 0.1 * jax.random.normal(k[2], (out_ch,), jnp.float32),
        "be1": 0.1 * jax.random.normal(k[3], (out_ch,), jnp.float32),
        "w2": 0.1 * jax.random.normal(k[4], (3, 3, out_ch, out_ch), jnp.float32),
        "b2": 0.1 * jax.random.normal(k[5], (out_ch,), jnp.float32),
        "g2": 1.0 + 0.1 * jax.random.normal(k[6], (out_ch,), jnp.float32),
        "be2": 0.1 * jax.random.normal(k[7], (out_ch,), jnp.float32),
    }

    x = jax.random.normal(k[8], (N, in_ch, H, W), jnp.float32)

    out = jax.block_until_ready(down_forward(x, params))
    ref = jax.block_until_ready(ref_forward(x, params))

    assert out.shape == (N, out_ch, H // 2, W // 2), out.shape
    max_err = float(jnp.max(jnp.abs(out - ref)))
    assert jnp.allclose(out, ref, atol=1e-4, rtol=1e-4), max_err

    print("KERNEL_OK")
</pallas_src>

<mosaic_0001>
module attributes {stable_mosaic.version = 11 : i64} {
  func.func @conv_bn_stats_kernel(%arg0: i32, %arg1: memref<1x16x16x128xf32, #tpu.memory_space<vmem>>, %arg2: memref<1152x128xf32, #tpu.memory_space<vmem>>, %arg3: memref<1x128xf32, #tpu.memory_space<vmem>>, %arg4: memref<1x128xf32, #tpu.memory_space<vmem>>, %arg5: memref<1x8x8x128xf32, #tpu.memory_space<vmem>>, %arg6: memref<1x8x128xf32, #tpu.memory_space<vmem>>, %arg7: memref<1x10x10x128xf32, #tpu.memory_space<vmem>>) attributes {dimension_semantics = [#tpu.dimension_semantics<parallel>], iteration_bounds = array<i64: 2>, scalar_prefetch = 0 : i64, scratch_operands = 1 : i64, tpu.core_type = #tpu.core_type<tc>, window_params = [{transform_indices = @transform_0, window_bounds = array<i64: 1, 16, 16, 128>}, {pipeline_mode = #tpu.pipeline_mode<synchronous>, transform_indices = @transform_1, window_bounds = array<i64: 1152, 128>}, {pipeline_mode = #tpu.pipeline_mode<synchronous>, transform_indices = @transform_2, window_bounds = array<i64: 1, 128>}, {pipeline_mode = #tpu.pipeline_mode<synchronous>, transform_indices = @transform_3, window_bounds = array<i64: 1, 128>}, {transform_indices = @transform_4, window_bounds = array<i64: 1, 8, 8, 128>}, {transform_indices = @transform_5, window_bounds = array<i64: 1, 8, 128>}]} {
    %c0 = arith.constant 0 : index
    %c0_0 = arith.constant 0 : index
    %c0_1 = arith.constant 0 : index
    %c0_2 = arith.constant 0 : index
    %0 = vector.load %arg1[%c0, %c0_0, %c0_1, %c0_2] : memref<1x16x16x128xf32, #tpu.memory_space<vmem>>, vector<1x16x16x128xf32>
    %1 = vector.shape_cast %0 : vector<1x16x16x128xf32> to vector<16x16x128xf32>
    %2 = vector.shape_cast %1 : vector<16x16x128xf32> to vector<16x8x2x128xf32>
    %3 = vector.extract_strided_slice %2 {offsets = [0, 0, 0, 0], sizes = [16, 8, 1, 128], strides = [1, 1, 1, 1]} : vector<16x8x2x128xf32> to vector<16x8x1x128xf32>
    %4 = vector.shape_cast %3 : vector<16x8x1x128xf32> to vector<16x8x128xf32>
    %5 = vector.extract_strided_slice %2 {offsets = [0, 0, 1, 0], sizes = [16, 8, 1, 128], strides = [1, 1, 1, 1]} : vector<16x8x2x128xf32> to vector<16x8x1x128xf32>
    %6 = vector.shape_cast %5 : vector<16x8x1x128xf32> to vector<16x8x128xf32>
    %7 = arith.maximumf %4, %6 : vector<16x8x128xf32>
    %8 = vector.shape_cast %7 : vector<16x8x128xf32> to vector<8x2x8x128xf32>
    %9 = vector.extract_strided_slice %8 {offsets = [0, 0, 0, 0], sizes = [8, 1, 8, 128], strides = [1, 1, 1, 1]} : vector<8x2x8x128xf32> to vector<8x1x8x128xf32>
    %10 = vector.shape_cast %9 : vector<8x1x8x128xf32> to vector<8x8x128xf32>
    %11 = vector.extract_strided_slice %8 {offsets = [0, 1, 0, 0], sizes = [8, 1, 8, 128], strides = [1, 1, 1, 1]} : vector<8x2x8x128xf32> to vector<8x1x8x128xf32>
    %12 = vector.shape_cast %11 : vector<8x1x8x128xf32> to vector<8x8x128xf32>
    %13 = arith.maximumf %10, %12 : vector<8x8x128xf32>
    %cst = arith.constant 0.000000e+00 : f32
    %14 = vector.broadcast %cst : f32 to vector<1x10x10x128xf32>
    %c0_3 = arith.constant 0 : index
    %c0_4 = arith.constant 0 : index
    %c0_5 = arith.constant 0 : index
    %c0_6 = arith.constant 0 : index
    %15 = vector.load %arg7[%c0_3, %c0_4, %c0_5, %c0_6] : memref<1x10x10x128xf32, #tpu.memory_space<vmem>>, vector<1x10x10x128xf32>
    tpu.vector_store %arg7[%c0_3, %c0_4, %c0_5, %c0_6], %14 {strides = array<i32>} : memref<1x10x10x128xf32, #tpu.memory_space<vmem>>, vector<1x10x10x128xf32>,
    %c0_7 = arith.constant 0 : index
    %c1 = arith.constant 1 : index
    %c1_8 = arith.constant 1 : index
    %c0_9 = arith.constant 0 : index
    %16 = vector.load %arg7[%c0_7, %c1, %c1_8, %c0_9] : memref<1x10x10x128xf32, #tpu.memory_space<vmem>>, vector<1x8x8x128xf32>
    %17 = vector.shape_cast %16 : vector<1x8x8x128xf32> to vector<8x8x128xf32>
    %18 = vector.shape_cast %13 : vector<8x8x128xf32> to vector<1x8x8x128xf32>
    tpu.vector_store %arg7[%c0_7, %c1, %c1_8, %c0_9], %18 {strides = array<i32>} : memref<1x10x10x128xf32, #tpu.memory_space<vmem>>, vector<1x8x8x128xf32>,
    %c0_10 = arith.constant 0 : index
    %c0_11 = arith.constant 0 : index
    %c0_12 = arith.constant 0 : index
    %c0_13 = arith.constant 0 : index
    %19 = vector.load %arg7[%c0_10, %c0_11, %c0_12, %c0_13] : memref<1x10x10x128xf32, #tpu.memory_space<vmem>>, vector<1x10x10x128xf32>
    %20 = vector.shape_cast %19 : vector<1x10x10x128xf32> to vector<10x10x128xf32>
    %21 = vector.extract_strided_slice %20 {offsets = [0, 0, 0], sizes = [8, 8, 128], strides = [1, 1, 1]} : vector<10x10x128xf32> to vector<8x8x128xf32>
    %22 = vector.shape_cast %21 : vector<8x8x128xf32> to vector<64x128xf32>
    %23 = vector.extract_strided_slice %20 {offsets = [0, 1, 0], sizes = [8, 8, 128], strides = [1, 1, 1]} : vector<10x10x128xf32> to vector<8x8x128xf32>
    %24 = vector.shape_cast %23 : vector<8x8x128xf32> to vector<64x128xf32>
    %25 = vector.extract_strided_slice %20 {offsets = [0, 2, 0], sizes = [8, 8, 128], strides = [1, 1, 1]} : vector<10x10x128xf32> to vector<8x8x128xf32>
    %26 = vector.shape_cast %25 : vector<8x8x128xf32> to vector<64x128xf32>
    %27 = vector.extract_strided_slice %20 {offsets = [1, 0, 0], sizes = [8, 8, 128], strides = [1, 1, 1]} : vector<10x10x128xf32> to vector<8x8x128xf32>
    %28 = vector.shape_cast %27 : vector<8x8x128xf32> to vector<64x128xf32>
    %29 = vector.extract_strided_slice %20 {offsets = [1, 1, 0], sizes = [8, 8, 128], strides = [1, 1, 1]} : vector<10x10x128xf32> to vector<8x8x128xf32>
    %30 = vector.shape_cast %29 : vector<8x8x128xf32> to vector<64x128xf32>
    %31 = vector.extract_strided_slice %20 {offsets = [1, 2, 0], sizes = [8, 8, 128], strides = [1, 1, 1]} : vector<10x10x128xf32> to vector<8x8x128xf32>
    %32 = vector.shape_cast %31 : vector<8x8x128xf32> to vector<64x128xf32>
    %33 = vector.extract_strided_slice %20 {offsets = [2, 0, 0], sizes = [8, 8, 128], strides = [1, 1, 1]} : vector<10x10x128xf32> to vector<8x8x128xf32>
    %34 = vector.shape_cast %33 : vector<8x8x128xf32> to vector<64x128xf32>
    %35 = vector.extract_strided_slice %20 {offsets = [2, 1, 0], sizes = [8, 8, 128], strides = [1, 1, 1]} : vector<10x10x128xf32> to vector<8x8x128xf32>
    %36 = vector.shape_cast %35 : vector<8x8x128xf32> to vector<64x128xf32>
    %37 = vector.extract_strided_slice %20 {offsets = [2, 2, 0], sizes = [8, 8, 128], strides = [1, 1, 1]} : vector<10x10x128xf32> to vector<8x8x128xf32>
    %38 = vector.shape_cast %37 : vector<8x8x128xf32> to vector<64x128xf32>
    %39 = tpu.concatenate %22, %24, %26, %28, %30, %32, %34, %36, %38 in 1 : vector<64x128xf32>, vector<64x128xf32>, vector<64x128xf32>, vector<64x128xf32>, vector<64x128xf32>, vector<64x128xf32>, vector<64x128xf32>, vector<64x128xf32>, vector<64x128xf32> -> vector<64x1152xf32>
    %c0_14 = arith.constant 0 : index
    %c0_15 = arith.constant 0 : index
    %40 = vector.load %arg2[%c0_14, %c0_15] : memref<1152x128xf32, #tpu.memory_space<vmem>>, vector<1152x128xf32>
    %cst_16 = arith.constant dense<0.000000e+00> : vector<64x128xf32>
    %41 = tpu.matmul %39, %40, %cst_16 {dimension_numbers = #tpu.dot_dimension_numbers<[1], [0], [0], [1], [0, 0, 1, 1], [], []>} : vector<64x1152xf32>, vector<1152x128xf32>, vector<64x128xf32> -> vector<64x128xf32>
    %42 = vector.shape_cast %41 : vector<64x128xf32> to vector<1x8x8x128xf32>
    %c0_17 = arith.constant 0 : index
    %c0_18 = arith.constant 0 : index
    %c0_19 = arith.constant 0 : index
    %c0_20 = arith.constant 0 : index
    %43 = vector.load %arg5[%c0_17, %c0_18, %c0_19, %c0_20] : memref<1x8x8x128xf32, #tpu.memory_space<vmem>>, vector<1x8x8x128xf32>
    tpu.vector_store %arg5[%c0_17, %c0_18, %c0_19, %c0_20], %42 {strides = array<i32>} : memref<1x8x8x128xf32, #tpu.memory_space<vmem>>, vector<1x8x8x128xf32>,
    %cst_21 = arith.constant dense<0.000000e+00> : vector<128xf32>
    %44 = vector.multi_reduction <add>, %41, %cst_21 [0] : vector<64x128xf32> to vector<128xf32>
    %45 = vector.shape_cast %44 : vector<128xf32> to vector<1x128xf32>
    %46 = arith.mulf %41, %41 : vector<64x128xf32>
    %cst_22 = arith.constant dense<0.000000e+00> : vector<128xf32>
    %47 = vector.multi_reduction <add>, %46, %cst_22 [0] : vector<64x128xf32> to vector<128xf32>
    %48 = vector.shape_cast %47 : vector<128xf32> to vector<1x128xf32>
    %49 = tpu.iota {dimensions = array<i32: 0>} : vector<8x128xi32>
    %c0_i32 = arith.constant 0 : i32
    %50 = vector.broadcast %c0_i32 : i32 to vector<8x128xi32>
    %51 = arith.cmpi eq, %49, %50 : vector<8x128xi32>
    %c1_i32 = arith.constant 1 : i32
    %52 = vector.broadcast %c1_i32 : i32 to vector<8x128xi32>
    %53 = arith.cmpi eq, %49, %52 : vector<8x128xi32>
    %cst_23 = arith.constant 0.000000e+00 : f32
    %54 = vector.shape_cast %48 : vector<1x128xf32> to vector<1x128xf32>
    %55 = vector.broadcast %54 : vector<1x128xf32> to vector<8x128xf32>
    %56 = vector.broadcast %cst_23 : f32 to vector<8x128xf32>
    %57 = arith.select %53, %55, %56 : vector<8x128xi1>, vector<8x128xf32>
    %58 = vector.shape_cast %45 : vector<1x128xf32> to vector<1x128xf32>
    %59 = vector.broadcast %58 : vector<1x128xf32> to vector<8x128xf32>
    %60 = arith.select %51, %59, %57 : vector<8x128xi1>, vector<8x128xf32>
    %61 = vector.shape_cast %60 : vector<8x128xf32> to vector<1x8x128xf32>
    %c0_24 = arith.constant 0 : index
    %c0_25 = arith.constant 0 : index
    %c0_26 = arith.constant 0 : index
    %62 = vector.load %arg6[%c0_24, %c0_25, %c0_26] : memref<1x8x128xf32, #tpu.memory_space<vmem>>, vector<1x8x128xf32>
    tpu.vector_store %arg6[%c0_24, %c0_25, %c0_26], %61 {strides = array<i32>} : memref<1x8x128xf32, #tpu.memory_space<vmem>>, vector<1x8x128xf32>,
    return
  }
  func.func @transform_0(%arg0: i32) -> (i32, i32, i32, i32) {
    %c0_i32 = arith.constant 0 : i32
    %c0_i32_0 = arith.constant 0 : i32
    %c0_i32_1 = arith.constant 0 : i32
    %c0_i32_2 = arith.constant 0 : i32
    return %arg0, %c0_i32, %c0_i32_0, %c0_i32_1 : i32, i32, i32, i32
  }
  func.func @transform_1(%arg0: i32) -> (i32, i32) {
    %c0_i32 = arith.constant 0 : i32
    %c0_i32_0 = arith.constant 0 : i32
    %c0_i32_1 = arith.constant 0 : i32
    return %c0_i32, %c0_i32_0 : i32, i32
  }
  func.func @transform_2(%arg0: i32) -> (i32, i32) {
    %c0_i32 = arith.constant 0 : i32
    %c0_i32_0 = arith.constant 0 : i32
    %c0_i32_1 = arith.constant 0 : i32
    return %c0_i32, %c0_i32_0 : i32, i32
  }
  func.func @transform_3(%arg0: i32) -> (i32, i32) {
    %c0_i32 = arith.constant 0 : i32
    %c0_i32_0 = arith.constant 0 : i32
    %c0_i32_1 = arith.constant 0 : i32
    return %c0_i32, %c0_i32_0 : i32, i32
  }
  func.func @transform_4(%arg0: i32) -> (i32, i32, i32, i32) {
    %c0_i32 = arith.constant 0 : i32
    %c0_i32_0 = arith.constant 0 : i32
    %c0_i32_1 = arith.constant 0 : i32
    %c0_i32_2 = arith.constant 0 : i32
    return %arg0, %c0_i32, %c0_i32_0, %c0_i32_1 : i32, i32, i32, i32
  }
  func.func @transform_5(%arg0: i32) -> (i32, i32, i32) {
    %c0_i32 = arith.constant 0 : i32
    %c0_i32_0 = arith.constant 0 : i32
    %c0_i32_1 = arith.constant 0 : i32
    return %arg0, %c0_i32, %c0_i32_0 : i32, i32, i32
  }
}

</mosaic_0001>

<llo_original>
// kernel: tpu_custom_call.1
$region0: #{tpu_custom_call.1}
  #allocation0 [shape = 'u32[]', space=smem, size = 0x4, offset = 0x4, fixed_abs, tag = 'smem constant byte address 0x4 - core index']
  #allocation1 [shape = 'u32[144,128]{1,0:T(1,128)}', space=vmem, size = 0x12000, scoped, tag = 'internal scratch']
  #allocation2 [shape = 'f32[1,10,10,128]{3,2,1,0:T(8,128)}', space=vmem, size = 0x14000, scoped, tag = 'scratch operand']
  %s0 = inlined_call_operand.hbm [shape: f32[2,16,16,128], index: 0, kind: input, shape index: {}]
  %s1 = inlined_call_operand.hbm [shape: f32[1152,128], index: 1, kind: input, shape index: {}]
  %s2 = inlined_call_operand.vmem [shape: f32[1,128], index: 2, kind: input, shape index: {}]
  %s3 = inlined_call_operand.vmem [shape: f32[1,128], index: 3, kind: input, shape index: {}]
  %s4 = inlined_call_operand.hbm [shape: f32[2,8,8,128], index: 4, kind: output, shape index: {0}]
  %s5 = inlined_call_operand.hbm [shape: f32[2,8,128], index: 5, kind: output, shape index: {1}]
  %6 = xla_tuple %s4, %s5
  %s7 = sld [smem:[#allocation0]]
  $region65: #{tpu_custom_call.1} parent=0
    _
  %s9 = ssub.s32 1, %s7
  %s10 = scalar_select 0, %s9, %s7
  $region1: #{tpu_custom_call.1} parent=0
    #allocation3 [shape = 'u8[262144]{0}', space=vmem, size = 0x40000, scoped, tag = 'input window, operand 0']
    #allocation4 [shape = 's32[2]{0}', space=sflag, size = 0x8, scoped, tag = 'scoped memory for tpu_custom_call.1']
    #allocation5 [shape = 's32[2]{0}', space=sflag, size = 0x8, scoped, tag = 'scoped memory for tpu_custom_call.1']
    #allocation6 [shape = 'u8[589824]{0}', space=vmem, size = 0x90000, scoped, tag = 'input window, operand 1, single buffered']
    #allocation7 [shape = 's32[1]{0}', space=sflag, size = 0x4, scoped, tag = 'scoped memory for tpu_custom_call.1']
    #allocation8 [shape = 'u8[65536]{0}', space=vmem, size = 0x10000, scoped, tag = 'output window, operand 0']
    #allocation9 [shape = 'u8[8192]{0}', space=vmem, size = 0x2000, scoped, tag = 'output window, operand 1']
    #allocation10 [shape = 's32[2]{0}', space=sflag, size = 0x8, scoped, tag = 'scoped memory for tpu_custom_call.1']
    %11 = vsyncpa [#allocation4], 0
    %s12 = scalar_lea.sflag [#allocation4], 1
    %13 = vsyncpa %s12, 0
    %14 = vsyncpa [#allocation7], 0
    %15 = vsyncpa [#allocation5], 0
    %s16 = scalar_lea.sflag [#allocation5], 1
    %17 = vsyncpa %s16, 0
    %18 = vsyncpa [#allocation10], 0
    %s19 = scalar_lea.sflag [#allocation10], 1
    %20 = vsyncpa %s19, 0
    loop: start=0, step=1, limit=4
    $region2: #{tpu_custom_call.1} parent=1 // loop_pre_header
      _
    $region3: #{tpu_custom_call.1} parent=1 // loop_header
      %s22 = sphi 0, %s26
      %p23 = scmp.ge.s32.totalorder %s22, 4
      %s32 = sphi 0, %s34
      %s35 = sphi 0, %s32
      %s36 = sphi 0, %s35
      %s52 = sphi 0, %s36
      %s56 = sphi 0, %s56
      %s58 = sphi 0, %s56
      %s59 = sphi 0, %s58
      %s73 = sphi 0, %s59
      %s77 = sphi 0, %s77
      %s79 = sphi 0, %s77
      %s80 = sphi 0, %s79
      %s94 = sphi 0, %s80
      %s98 = sphi 0, %s98
      %s100 = sphi 0, %s98
      %s101 = sphi 0, %s100
      %s115 = sphi 0, %s101
      %s121 = sphi 0, %s123
      %s124 = sphi 0, %s121
      %s125 = sphi 0, %s124
      %s141 = sphi 0, %s125
      %s147 = sphi 0, %s149
      %s150 = sphi 0, %s147
      %s151 = sphi 0, %s150
      %s167 = sphi 0, %s151
    $region4: #{tpu_custom_call.1} parent=1 // loop_header_branch
      %25 = sbr.rel (%p23) target = $region8
    $region5: #{tpu_custom_call.1} parent=1 // loop_body
      %s27 = ssub.s32 %s22, 1
      %s28 = ssub.s32 %s22, 2
      %s29 = sadd.s32 %s22, 1
      %s30 = ssub.s32 %s22, %s29
      %p31 = scmp.eq.s32.totalorder %s30, 0
      %s33 = sadd.s32 %s32, 1
      %s34 = scalar_select %p31, %s32, %s33
      %p37 = pneg %p31
      %p38 = scmp.eq.s32.totalorder %s22, 1
      %p39 = por %p37, %p38
      %p40 = scmp.ne.s32.totalorder %s32, %s35
      %p41 = scmp.eq.s32.totalorder %s22, 0
      %p42 = por %p40, %p41
      %p43 = scmp.ne.s32.totalorder %s32, %s35
      %p44 = scmp.eq.s32.totalorder %s27, 1
      %p45 = por %p43, %p44
      %p46 = scmp.ne.s32.totalorder %s35, %s36
      %p47 = scmp.eq.s32.totalorder %s27, 0
      %p48 = por %p46, %p47
      %p49 = scmp.ne.s32.totalorder %s35, %s36
      %p50 = scmp.eq.s32.totalorder %s28, 1
      %p51 = por %p49, %p50
      %p53 = scmp.ne.s32.totalorder %s36, %s52
      %p54 = scmp.eq.s32.totalorder %s28, 0
      %p55 = por %p53, %p54
      %s57 = sadd.s32 %s56, 1
      %p60 = scmp.eq.s32.totalorder %s22, 1
      %p61 = scmp.ne.s32.totalorder %s56, %s58
      %p62 = scmp.eq.s32.totalorder %s22, 0
      %p63 = por %p61, %p62
      %p64 = scmp.ne.s32.totalorder %s56, %s58
      %p65 = scmp.eq.s32.totalorder %s27, 1
      %p66 = por %p64, %p65
      %p67 = scmp.ne.s32.totalorder %s58, %s59
      %p68 = scmp.eq.s32.totalorder %s27, 0
      %p69 = por %p67, %p68
      %p70 = scmp.ne.s32.totalorder %s58, %s59
      %p71 = scmp.eq.s32.totalorder %s28, 1
      %p72 = por %p70, %p71
      %p74 = scmp.ne.s32.totalorder %s59, %s73
      %p75 = scmp.eq.s32.totalorder %s28, 0
      %p76 = por %p74, %p75
      %s78 = sadd.s32 %s77, 1
      %p81 = scmp.eq.s32.totalorder %s22, 1
      %p82 = scmp.ne.s32.totalorder %s77, %s79
      %p83 = scmp.eq.s32.totalorder %s22, 0
      %p84 = por %p82, %p83
      %p85 = scmp.ne.s32.totalorder %s77, %s79
      %p86 = scmp.eq.s32.totalorder %s27, 1
      %p87 = por %p85, %p86
      %p88 = scmp.ne.s32.totalorder %s79, %s80
      %p89 = scmp.eq.s32.totalorder %s27, 0
      %p90 = por %p88, %p89
      %p91 = scmp.ne.s32.totalorder %s79, %s80
      %p92 = scmp.eq.s32.totalorder %s28, 1
      %p93 = por %p91, %p92
      %p95 = scmp.ne.s32.totalorder %s80, %s94
      %p96 = scmp.eq.s32.totalorder %s28, 0
      %p97 = por %p95, %p96
      %s99 = sadd.s32 %s98, 1
      %p102 = scmp.eq.s32.totalorder %s22, 1
      %p103 = scmp.ne.s32.totalorder %s98, %s100
      %p104 = scmp.eq.s32.totalorder %s22, 0
      %p105 = por %p103, %p104
      %p106 = scmp.ne.s32.totalorder %s98, %s100
      %p107 = scmp.eq.s32.totalorder %s27, 1
      %p108 = por %p106, %p107
      %p109 = scmp.ne.s32.totalorder %s100, %s101
      %p110 = scmp.eq.s32.totalorder %s27, 0
      %p111 = por %p109, %p110
      %p112 = scmp.ne.s32.totalorder %s100, %s101
      %p113 = scmp.eq.s32.totalorder %s28, 1
      %p114 = por %p112, %p113
      %p116 = scmp.ne.s32.totalorder %s101, %s115
      %p117 = scmp.eq.s32.totalorder %s28, 0
      %p118 = por %p116, %p117
      %s119 = ssub.s32 %s22, %s29
      %p120 = scmp.eq.s32.totalorder %s119, 0
      %s122 = sadd.s32 %s121, 1
      %s123 = scalar_select %p120, %s121, %s122
      %p126 = pneg %p120
      %p127 = scmp.eq.s32.totalorder %s22, 1
      %p128 = por %p126, %p127
      %p129 = scmp.ne.s32.totalorder %s121, %s124
      %p130 = scmp.eq.s32.totalorder %s22, 0
      %p131 = por %p129, %p130
      %p132 = scmp.ne.s32.totalorder %s121, %s124
      %p133 = scmp.eq.s32.totalorder %s27, 1
      %p134 = por %p132, %p133
      %p135 = scmp.ne.s32.totalorder %s124, %s125
      %p136 = scmp.eq.s32.totalorder %s27, 0
      %p137 = por %p135, %p136
      %p138 = scmp.ne.s32.totalorder %s124, %s125
      %p139 = scmp.eq.s32.totalorder %s28, 1
      %p140 = por %p138, %p139
      %p142 = scmp.ne.s32.totalorder %s125, %s141
      %p143 = scmp.eq.s32.totalorder %s28, 0
      %p144 = por %p142, %p143
      %s145 = ssub.s32 %s22, %s29
      %p146 = scmp.eq.s32.totalorder %s145, 0
      %s148 = sadd.s32 %s147, 1
      %s149 = scalar_select %p146, %s147, %s148
      %p152 = pneg %p146
      %p153 = scmp.eq.s32.totalorder %s22, 1
      %p154 = por %p152, %p153
      %p155 = scmp.ne.s32.totalorder %s147, %s150
      %p156 = scmp.eq.s32.totalorder %s22, 0
      %p157 = por %p155, %p156
      %p158 = scmp.ne.s32.totalorder %s147, %s150
      %p159 = scmp.eq.s32.totalorder %s27, 1
      %p160 = por %p158, %p159
      %p161 = scmp.ne.s32.totalorder %s150, %s151
      %p162 = scmp.eq.s32.totalorder %s27, 0
      %p163 = por %p161, %p162
      %p164 = scmp.ne.s32.totalorder %s150, %s151
      %p165 = scmp.eq.s32.totalorder %s28, 1
      %p166 = por %p164, %p165
      %p168 = scmp.ne.s32.totalorder %s151, %s167
      %p169 = scmp.eq.s32.totalorder %s28, 0
      %p170 = por %p168, %p169
      %p171 = scmp.le.s32.totalorder 1, %s22
      %p172 = scmp.lt.s32.totalorder %s22, 3
      %p173 = pnand %p171, %p172
      %p174 = pneg %p173
      // Predicated region
      $region9: #{tpu_custom_call.1} parent=5 // pred_check
        _
      $region10: #{tpu_custom_call.1} parent=5 // pred_check_branch
        %176 = sbr.rel (%p173) target = $region12
      $region11: #{tpu_custom_call.1} parent=5 // pred_region
        %s177 = ssub.s32 %s22, 1
        // Predicated region
        $region13: #{tpu_custom_call.1} parent=11 // pred_check
          %p178 = pneg %p69
        $region14: #{tpu_custom_call.1} parent=11 // pred_check_branch
          %180 = sbr.rel (%p178) target = $region16
        $region15: #{tpu_custom_call.1} parent=11 // pred_region
          %s182 = ssub.s32 18432, 18432
          %183 = vsyncadd [#allocation7], %s182
          %s184 = sshll.u32 [#allocation6], 4
          %s185 = int_to_ptr.vmem [resolvable:$true] %s184
          %190 = dma.hbm_to_vmem [thread:$0]  %s1, 18432, %s185, [#allocation7], 128, 128, 8
        $region16: #{tpu_custom_call.1} parent=11 // pred_fallthru
          _
        // Predicated region
        $region17: #{tpu_custom_call.1} parent=11 // pred_check
          %p191 = pneg %p90
        $region18: #{tpu_custom_call.1} parent=11 // pred_check_branch
          %193 = sbr.rel (%p191) target = $region20
        $region19: #{tpu_custom_call.1} parent=11 // pred_region
          _
        $region20: #{tpu_custom_call.1} parent=11 // pred_fallthru
          _
        // Predicated region
        $region21: #{tpu_custom_call.1} parent=11 // pred_check
          %p194 = pneg %p111
        $region22: #{tpu_custom_call.1} parent=11 // pred_check_branch
          %196 = sbr.rel (%p194) target = $region24
        $region23: #{tpu_custom_call.1} parent=11 // pred_region
          _
        $region24: #{tpu_custom_call.1} parent=11 // pred_fallthru
          _
      $region12: #{tpu_custom_call.1} parent=5 // pred_fallthru
        _
      %p197 = scmp.lt.s32.totalorder %s22, 2
      // Predicated region
      $region25: #{tpu_custom_call.1} parent=5 // pred_check
        %p198 = pneg %p197
      $region26: #{tpu_custom_call.1} parent=5 // pred_check_branch
        %200 = sbr.rel (%p198) target = $region28
      $region27: #{tpu_custom_call.1} parent=5 // pred_region
        // Predicated region
        $region29: #{tpu_custom_call.1} parent=27 // pred_check
          %p201 = pneg %p42
        $region30: #{tpu_custom_call.1} parent=27 // pred_check_branch
          %203 = sbr.rel (%p201) target = $region32
        $region31: #{tpu_custom_call.1} parent=27 // pred_region
          %s204 = sand.u32 %s32, 1
          %s205 = scalar_lea.sflag [#allocation4], %s204
          %s206 = sand.u32 %s32, 1
          %s207 = smul.addr %s206, 256
          %s208 = scalar_lea.vmem [#allocation3], %s207
          %s210 = ssub.s32 4096, 4096
          %211 = vsyncadd %s205, %s210
          %s212 = smul.addr %s22, 32
          %s213 = smul.addr %s212, 128
          %s214 = scalar_lea.hbm %s0, %s213
          %s215 = sshll.u32 %s208, 4
          %s216 = int_to_ptr.vmem [resolvable:$true] %s215
          %221 = dma.hbm_to_vmem [thread:$0]  %s214, 4096, %s216, %s205, 128, 128, 8
        $region32: #{tpu_custom_call.1} parent=27 // pred_fallthru
          _
      $region28: #{tpu_custom_call.1} parent=5 // pred_fallthru
        _
      %p222 = scmp.le.s32.totalorder 1, %s22
      %p223 = scmp.lt.s32.totalorder %s22, 3
      %p224 = pnand %p222, %p223
      %p225 = pneg %p224
      // Predicated region
      $region33: #{tpu_custom_call.1} parent=5 // pred_check
        _
      $region34: #{tpu_custom_call.1} parent=5 // pred_check_branch
        %227 = sbr.rel (%p224) target = $region36
      $region35: #{tpu_custom_call.1} parent=5 // pred_region
        %s228 = ssub.s32 %s22, 1
        %s229 = sand.u32 %s35, 1
        %s230 = scalar_lea.sflag [#allocation4], %s229
        %s231 = sand.u32 %s35, 1
        %s232 = smul.addr %s231, 256
        %s233 = scalar_lea.vmem [#allocation3], %s232
        // Predicated region
        $region37: #{tpu_custom_call.1} parent=35 // pred_check
          %p234 = pneg %p48
        $region38: #{tpu_custom_call.1} parent=35 // pred_check_branch
          %236 = sbr.rel (%p234) target = $region40
        $region39: #{tpu_custom_call.1} parent=35 // pred_region
          %237 = dma.done %s230, 4096
        $region40: #{tpu_custom_call.1} parent=35 // pred_fallthru
          _
        // Predicated region
        $region41: #{tpu_custom_call.1} parent=35 // pred_check
          %p238 = pneg %p69
        $region42: #{tpu_custom_call.1} parent=35 // pred_check_branch
          %240 = sbr.rel (%p238) target = $region44
        $region43: #{tpu_custom_call.1} parent=35 // pred_region
          %241 = dma.done [#allocation7], 18432
        $region44: #{tpu_custom_call.1} parent=35 // pred_fallthru
          _
        %s242 = sand.u32 %s35, 1
        %s243 = scalar_lea.sflag [#allocation4], %s242
        %s244 = sand.u32 %s35, 1
        %s245 = smul.addr %s244, 256
        %s246 = scalar_lea.vmem [#allocation3], %s245
        %p247 = pneg %p48
        %p248 = pneg %p45
        %p249 = pneg %p69
        %p250 = pneg %p66
        %p251 = pneg %p90
        %p252 = pneg %p87
        %p253 = pneg %p111
        %p254 = pneg %p108
        %p255 = pneg %p137
        %p256 = pneg %p134
        %s257 = sand.u32 %s124, 1
        %s258 = scalar_lea.sflag [#allocation5], %s257
        %s259 = sand.u32 %s124, 1
        %s260 = smul.addr %s259, 64
        %s261 = scalar_lea.vmem [#allocation8], %s260
        %p262 = pneg %p163
        %p263 = pneg %p160
        %s264 = sand.u32 %s150, 1
        %s265 = scalar_lea.sflag [#allocation10], %s264
        %s266 = sand.u32 %s150, 1
        %s267 = smul.addr %s266, 8
        %s268 = scalar_lea.vmem [#allocation9], %s267
        %v269 = vld [vmem:[%s233] sm:$0xff]
        %v270 = vld [vmem:[%s233 + $0x8] sm:$0xff]
        %v271 = vld [vmem:[%s233 + $0x10] sm:$0xff]
        %v272 = vld [vmem:[%s233 + $0x18] sm:$0xff]
        %v273 = vld [vmem:[%s233 + $0x20] sm:$0xff]
        %v274 = vld [vmem:[%s233 + $0x28] sm:$0xff]
        %v275 = vld [vmem:[%s233 + $0x30] sm:$0xff]
        %v276 = vld [vmem:[%s233 + $0x38] sm:$0xff]
        %v277 = vld [vmem:[%s233 + $0x40] sm:$0xff]
        %v278 = vld [vmem:[%s233 + $0x48] sm:$0xff]
        %v279 = vld [vmem:[%s233 + $0x50] sm:$0xff]
        %v280 = vld [vmem:[%s233 + $0x58] sm:$0xff]
        %v281 = vld [vmem:[%s233 + $0x60] sm:$0xff]
        %v282 = vld [vmem:[%s233 + $0x68] sm:$0xff]
        %v283 = vld [vmem:[%s233 + $0x70] sm:$0xff]
        %v284 = vld [vmem:[%s233 + $0x78] sm:$0xff]
        %v285 = vld [vmem:[%s233 + $0x80] sm:$0xff]
        %v286 = vld [vmem:[%s233 + $0x88] sm:$0xff]
        %v287 = vld [vmem:[%s233 + $0x90] sm:$0xff]
        %v288 = vld [vmem:[%s233 + $0x98] sm:$0xff]
        %v289 = vld [vmem:[%s233 + $0xa0] sm:$0xff]
        %v290 = vld [vmem:[%s233 + $0xa8] sm:$0xff]
        %v291 = vld [vmem:[%s233 + $0xb0] sm:$0xff]
        %v292 = vld [vmem:[%s233 + $0xb8] sm:$0xff]
        %v293 = vld [vmem:[%s233 + $0xc0] sm:$0xff]
        %v294 = vld [vmem:[%s233 + $0xc8] sm:$0xff]
        %v295 = vld [vmem:[%s233 + $0xd0] sm:$0xff]
        %v296 = vld [vmem:[%s233 + $0xd8] sm:$0xff]
        %v297 = vld [vmem:[%s233 + $0xe0] sm:$0xff]
        %v298 = vld [vmem:[%s233 + $0xe8] sm:$0xff]
        %v299 = vld [vmem:[%s233 + $0xf0] sm:$0xff]
        %v300 = vld [vmem:[%s233 + $0xf8] sm:$0xff]
        %v333 = vcombine.high %v269, %v269
        %v335 = vunpack.c.l.s4 1983009808
        %v336 = vunpack.c.0.s8 %v335
        %v337 = vlaneseq
        %v338 = vshrl.u32 %v337, 7
        %v339 = vsub.s32 %v336, %v338
        %v340 = vrot.slane %v269, %v339
        %v342 = vunpack.c.l.s4 1983009808
        %v343 = vunpack.c.0.s8 %v342
        %v344 = vlaneseq
        %v345 = vshrl.u32 %v344, 7
        %v346 = vsub.s32 %v343, %v345
        %v347 = vrot.slane %v333, %v346
        %v348 = vcombine.high %v340, %v340
        %v349 = vcombine.high %v347, %v347
        %v350 = vcombine.high %v270, %v270
        %v352 = vunpack.c.l.s4 1983009808
        %v353 = vunpack.c.0.s8 %v352
        %v354 = vlaneseq
        %v355 = vshrl.u32 %v354, 7
        %v356 = vsub.s32 %v353, %v355
        %v357 = vrot.slane %v270, %v356
        %v359 = vunpack.c.l.s4 1983009808
        %v360 = vunpack.c.0.s8 %v359
        %v361 = vlaneseq
        %v362 = vshrl.u32 %v361, 7
        %v363 = vsub.s32 %v360, %v362
        %v364 = vrot.slane %v350, %v363
        %v365 = vcombine.high %v357, %v357
        %v366 = vcombine.high %v364, %v364
        %v367 = vcombine.high %v271, %v271
        %v369 = vunpack.c.l.s4 1983009808
        %v370 = vunpack.c.0.s8 %v369
        %v371 = vlaneseq
        %v372 = vshrl.u32 %v371, 7
        %v373 = vsub.s32 %v370, %v372
        %v374 = vrot.slane %v271, %v373
        %v376 = vunpack.c.l.s4 1983009808
        %v377 = vunpack.c.0.s8 %v376
        %v378 = vlaneseq
        %v379 = vshrl.u32 %v378, 7
        %v380 = vsub.s32 %v377, %v379
        %v381 = vrot.slane %v367, %v380
        %v382 = vcombine.high %v374, %v374
        %v383 = vcombine.high %v381, %v381
        %v384 = vcombine.high %v272, %v272
        %v386 = vunpack.c.l.s4 1983009808
        %v387 = vunpack.c.0.s8 %v386
        %v388 = vlaneseq
        %v389 = vshrl.u32 %v388, 7
        %v390 = vsub.s32 %v387, %v389
        %v391 = vrot.slane %v272, %v390
        %v393 = vunpack.c.l.s4 1983009808
        %v394 = vunpack.c.0.s8 %v393
        %v395 = vlaneseq
        %v396 = vshrl.u32 %v395, 7
        %v397 = vsub.s32 %v394, %v396
        %v398 = vrot.slane %v384, %v397
        %v399 = vcombine.high %v391, %v391
        %v400 = vcombine.high %v398, %v398
        %v401 = vcombine.high %v273, %v273
        %v403 = vunpack.c.l.s4 1983009808
        %v404 = vunpack.c.0.s8 %v403
        %v405 = vlaneseq
        %v406 = vshrl.u32 %v405, 7
        %v407 = vsub.s32 %v404, %v406
        %v408 = vrot.slane %v273, %v407
        %v410 = vunpack.c.l.s4 1983009808
        %v411 = vunpack.c.0.s8 %v410
        %v412 = vlaneseq
        %v413 = vshrl.u32 %v412, 7
        %v414 = vsub.s32 %v411, %v413
        %v415 = vrot.slane %v401, %v414
        %v416 = vcombine.high %v408, %v408
        %v417 = vcombine.high %v415, %v415
        %v418 = vcombine.high %v274, %v274
        %v420 = vunpack.c.l.s4 1983009808
        %v421 = vunpack.c.0.s8 %v420
        %v422 = vlaneseq
        %v423 = vshrl.u32 %v422, 7
        %v424 = vsub.s32 %v421, %v423
        %v425 = vrot.slane %v274, %v424
        %v427 = vunpack.c.l.s4 1983009808
        %v428 = vunpack.c.0.s8 %v427
        %v429 = vlaneseq
        %v430 = vshrl.u32 %v429, 7
        %v431 = vsub.s32 %v428, %v430
        %v432 = vrot.slane %v418, %v431
        %v433 = vcombine.high %v425, %v425
        %v434 = vcombine.high %v432, %v432
        %v435 = vcombine.high %v275, %v275
        %v437 = vunpack.c.l.s4 1983009808
        %v438 = vunpack.c.0.s8 %v437
        %v439 = vlaneseq
        %v440 = vshrl.u32 %v439, 7
        %v441 = vsub.s32 %v438, %v440
        %v442 = vrot.slane %v275, %v441
        %v444 = vunpack.c.l.s4 1983009808
        %v445 = vunpack.c.0.s8 %v444
        %v446 = vlaneseq
        %v447 = vshrl.u32 %v446, 7
        %v448 = vsub.s32 %v445, %v447
        %v449 = vrot.slane %v435, %v448
        %v450 = vcombine.high %v442, %v442
        %v451 = vcombine.high %v449, %v449
        %v452 = vcombine.high %v276, %v276
        %v454 = vunpack.c.l.s4 1983009808
        %v455 = vunpack.c.0.s8 %v454
        %v456 = vlaneseq
        %v457 = vshrl.u32 %v456, 7
        %v458 = vsub.s32 %v455, %v457
        %v459 = vrot.slane %v276, %v458
        %v461 = vunpack.c.l.s4 1983009808
        %v462 = vunpack.c.0.s8 %v461
        %v463 = vlaneseq
        %v464 = vshrl.u32 %v463, 7
        %v465 = vsub.s32 %v462, %v464
        %v466 = vrot.slane %v452, %v465
        %v467 = vcombine.high %v459, %v459
        %v468 = vcombine.high %v466, %v466
        %v469 = vcombine.high %v277, %v277
        %v471 = vunpack.c.l.s4 1983009808
        %v472 = vunpack.c.0.s8 %v471
        %v473 = vlaneseq
        %v474 = vshrl.u32 %v473, 7
        %v475 = vsub.s32 %v472, %v474
        %v476 = vrot.slane %v277, %v475
        %v478 = vunpack.c.l.s4 1983009808
        %v479 = vunpack.c.0.s8 %v478
        %v480 = vlaneseq
        %v481 = vshrl.u32 %v480, 7
        %v482 = vsub.s32 %v479, %v481
        %v483 = vrot.slane %v469, %v482
        %v484 = vcombine.high %v476, %v476
        %v485 = vcombine.high %v483, %v483
        %v486 = vcombine.high %v278, %v278
        %v488 = vunpack.c.l.s4 1983009808
        %v489 = vunpack.c.0.s8 %v488
        %v490 = vlaneseq
        %v491 = vshrl.u32 %v490, 7
        %v492 = vsub.s32 %v489, %v491
        %v493 = vrot.slane %v278, %v492
        %v495 = vunpack.c.l.s4 1983009808
        %v496 = vunpack.c.0.s8 %v495
        %v497 = vlaneseq
        %v498 = vshrl.u32 %v497, 7
        %v499 = vsub.s32 %v496, %v498
        %v500 = vrot.slane %v486, %v499
        %v501 = vcombine.high %v493, %v493
        %v502 = vcombine.high %v500, %v500
        %v503 = vcombine.high %v279, %v279
        %v505 = vunpack.c.l.s4 1983009808
        %v506 = vunpack.c.0.s8 %v505
        %v507 = vlaneseq
        %v508 = vshrl.u32 %v507, 7
        %v509 = vsub.s32 %v506, %v508
        %v510 = vrot.slane %v279, %v509
        %v512 = vunpack.c.l.s4 1983009808
        %v513 = vunpack.c.0.s8 %v512
        %v514 = vlaneseq
        %v515 = vshrl.u32 %v514, 7
        %v516 = vsub.s32 %v513, %v515
        %v517 = vrot.slane %v503, %v516
        %v518 = vcombine.high %v510, %v510
        %v519 = vcombine.high %v517, %v517
        %v520 = vcombine.high %v280, %v280
        %v522 = vunpack.c.l.s4 1983009808
        %v523 = vunpack.c.0.s8 %v522
        %v524 = vlaneseq
        %v525 = vshrl.u32 %v524, 7
        %v526 = vsub.s32 %v523, %v525
        %v527 = vrot.slane %v280, %v526
        %v529 = vunpack.c.l.s4 1983009808
        %v530 = vunpack.c.0.s8 %v529
        %v531 = vlaneseq
        %v532 = vshrl.u32 %v531, 7
        %v533 = vsub.s32 %v530, %v532
        %v534 = vrot.slane %v520, %v533
        %v535 = vcombine.high %v527, %v527
        %v536 = vcombine.high %v534, %v534
        %v537 = vcombine.high %v281, %v281
        %v539 = vunpack.c.l.s4 1983009808
        %v540 = vunpack.c.0.s8 %v539
        %v541 = vlaneseq
        %v542 = vshrl.u32 %v541, 7
        %v543 = vsub.s32 %v540, %v542
        %v544 = vrot.slane %v281, %v543
        %v546 = vunpack.c.l.s4 1983009808
        %v547 = vunpack.c.0.s8 %v546
        %v548 = vlaneseq
        %v549 = vshrl.u32 %v548, 7
        %v550 = vsub.s32 %v547, %v549
        %v551 = vrot.slane %v537, %v550
        %v552 = vcombine.high %v544, %v544
        %v553 = vcombine.high %v551, %v551
        %v554 = vcombine.high %v282, %v282
        %v556 = vunpack.c.l.s4 1983009808
        %v557 = vunpack.c.0.s8 %v556
        %v558 = vlaneseq
        %v559 = vshrl.u32 %v558, 7
        %v560 = vsub.s32 %v557, %v559
        %v561 = vrot.slane %v282, %v560
        %v563 = vunpack.c.l.s4 1983009808
        %v564 = vunpack.c.0.s8 %v563
        %v565 = vlaneseq
        %v566 = vshrl.u32 %v565, 7
        %v567 = vsub.s32 %v564, %v566
        %v568 = vrot.slane %v554, %v567
        %v569 = vcombine.high %v561, %v561
        %v570 = vcombine.high %v568, %v568
        %v571 = vcombine.high %v283, %v283
        %v573 = vunpack.c.l.s4 1983009808
        %v574 = vunpack.c.0.s8 %v573
        %v575 = vlaneseq
        %v576 = vshrl.u32 %v575, 7
        %v577 = vsub.s32 %v574, %v576
        %v578 = vrot.slane %v283, %v577
        %v580 = vunpack.c.l.s4 1983009808
        %v581 = vunpack.c.0.s8 %v580
        %v582 = vlaneseq
        %v583 = vshrl.u32 %v582, 7
        %v584 = vsub.s32 %v581, %v583
        %v585 = vrot.slane %v571, %v584
        %v586 = vcombine.high %v578, %v578
        %v587 = vcombine.high %v585, %v585
        %v588 = vcombine.high %v284, %v284
        %v590 = vunpack.c.l.s4 1983009808
        %v591 = vunpack.c.0.s8 %v590
        %v592 = vlaneseq
        %v593 = vshrl.u32 %v592, 7
        %v594 = vsub.s32 %v591, %v593
        %v595 = vrot.slane %v284, %v594
        %v597 = vunpack.c.l.s4 1983009808
        %v598 = vunpack.c.0.s8 %v597
        %v599 = vlaneseq
        %v600 = vshrl.u32 %v599, 7
        %v601 = vsub.s32 %v598, %v600
        %v602 = vrot.slane %v588, %v601
        %v603 = vcombine.high %v595, %v595
        %v604 = vcombine.high %v602, %v602
        %v605 = vcombine.high %v285, %v285
        %v607 = vunpack.c.l.s4 1983009808
        %v608 = vunpack.c.0.s8 %v607
        %v609 = vlaneseq
        %v610 = vshrl.u32 %v609, 7
        %v611 = vsub.s32 %v608, %v610
        %v612 = vrot.slane %v285, %v611
        %v614 = vunpack.c.l.s4 1983009808
        %v615 = vunpack.c.0.s8 %v614
        %v616 = vlaneseq
        %v617 = vshrl.u32 %v616, 7
        %v618 = vsub.s32 %v615, %v617
        %v619 = vrot.slane %v605, %v618
        %v620 = vcombine.high %v612, %v612
        %v621 = vcombine.high %v619, %v619
        %v622 = vcombine.high %v286, %v286
        %v624 = vunpack.c.l.s4 1983009808
        %v625 = vunpack.c.0.s8 %v624
        %v626 = vlaneseq
        %v627 = vshrl.u32 %v626, 7
        %v628 = vsub.s32 %v625, %v627
        %v629 = vrot.slane %v286, %v628
        %v631 = vunpack.c.l.s4 1983009808
        %v632 = vunpack.c.0.s8 %v631
        %v633 = vlaneseq
        %v634 = vshrl.u32 %v633, 7
        %v635 = vsub.s32 %v632, %v634
        %v636 = vrot.slane %v622, %v635
        %v637 = vcombine.high %v629, %v629
        %v638 = vcombine.high %v636, %v636
        %v639 = vcombine.high %v287, %v287
        %v641 = vunpack.c.l.s4 1983009808
        %v642 = vunpack.c.0.s8 %v641
        %v643 = vlaneseq
        %v644 = vshrl.u32 %v643, 7
        %v645 = vsub.s32 %v642, %v644
        %v646 = vrot.slane %v287, %v645
        %v648 = vunpack.c.l.s4 1983009808
        %v649 = vunpack.c.0.s8 %v648
        %v650 = vlaneseq
        %v651 = vshrl.u32 %v650, 7
        %v652 = vsub.s32 %v649, %v651
        %v653 = vrot.slane %v639, %v652
        %v654 = vcombine.high %v646, %v646
        %v655 = vcombine.high %v653, %v653
        %v656 = vcombine.high %v288, %v288
        %v658 = vunpack.c.l.s4 1983009808
        %v659 = vunpack.c.0.s8 %v658
        %v660 = vlaneseq
        %v661 = vshrl.u32 %v660, 7
        %v662 = vsub.s32 %v659, %v661
        %v663 = vrot.slane %v288, %v662
        %v665 = vunpack.c.l.s4 1983009808
        %v666 = vunpack.c.0.s8 %v665
        %v667 = vlaneseq
        %v668 = vshrl.u32 %v667, 7
        %v669 = vsub.s32 %v666, %v668
        %v670 = vrot.slane %v656, %v669
        %v671 = vcombine.high %v663, %v663
        %v672 = vcombine.high %v670, %v670
        %v673 = vcombine.high %v289, %v289
        %v675 = vunpack.c.l.s4 1983009808
        %v676 = vunpack.c.0.s8 %v675
        %v677 = vlaneseq
        %v678 = vshrl.u32 %v677, 7
        %v679 = vsub.s32 %v676, %v678
        %v680 = vrot.slane %v289, %v679
        %v682 = vunpack.c.l.s4 1983009808
        %v683 = vunpack.c.0.s8 %v682
        %v684 = vlaneseq
        %v685 = vshrl.u32 %v684, 7
        %v686 = vsub.s32 %v683, %v685
        %v687 = vrot.slane %v673, %v686
        %v688 = vcombine.high %v680, %v680
        %v689 = vcombine.high %v687, %v687
        %v690 = vcombine.high %v290, %v290
        %v692 = vunpack.c.l.s4 1983009808
        %v693 = vunpack.c.0.s8 %v692
        %v694 = vlaneseq
        %v695 = vshrl.u32 %v694, 7
        %v696 = vsub.s32 %v693, %v695
        %v697 = vrot.slane %v290, %v696
        %v699 = vunpack.c.l.s4 1983009808
        %v700 = vunpack.c.0.s8 %v699
        %v701 = vlaneseq
        %v702 = vshrl.u32 %v701, 7
        %v703 = vsub.s32 %v700, %v702
        %v704 = vrot.slane %v690, %v703
        %v705 = vcombine.high %v697, %v697
        %v706 = vcombine.high %v704, %v704
        %v707 = vcombine.high %v291, %v291
        %v709 = vunpack.c.l.s4 1983009808
        %v710 = vunpack.c.0.s8 %v709
        %v711 = vlaneseq
        %v712 = vshrl.u32 %v711, 7
        %v713 = vsub.s32 %v710, %v712
        %v714 = vrot.slane %v291, %v713
        %v716 = vunpack.c.l.s4 1983009808
        %v717 = vunpack.c.0.s8 %v716
        %v718 = vlaneseq
        %v719 = vshrl.u32 %v718, 7
        %v720 = vsub.s32 %v717, %v719
        %v721 = vrot.slane %v707, %v720
        %v722 = vcombine.high %v714, %v714
        %v723 = vcombine.high %v721, %v721
        %v724 = vcombine.high %v292, %v292
        %v726 = vunpack.c.l.s4 1983009808
        %v727 = vunpack.c.0.s8 %v726
        %v728 = vlaneseq
        %v729 = vshrl.u32 %v728, 7
        %v730 = vsub.s32 %v727, %v729
        %v731 = vrot.slane %v292, %v730
        %v733 = vunpack.c.l.s4 1983009808
        %v734 = vunpack.c.0.s8 %v733
        %v735 = vlaneseq
        %v736 = vshrl.u32 %v735, 7
        %v737 = vsub.s32 %v734, %v736
        %v738 = vrot.slane %v724, %v737
        %v739 = vcombine.high %v731, %v731
        %v740 = vcombine.high %v738, %v738
        %v741 = vcombine.high %v293, %v293
        %v743 = vunpack.c.l.s4 1983009808
        %v744 = vunpack.c.0.s8 %v743
        %v745 = vlaneseq
        %v746 = vshrl.u32 %v745, 7
        %v747 = vsub.s32 %v744, %v746
        %v748 = vrot.slane %v293, %v747
        %v750 = vunpack.c.l.s4 1983009808
        %v751 = vunpack.c.0.s8 %v750
        %v752 = vlaneseq
        %v753 = vshrl.u32 %v752, 7
        %v754 = vsub.s32 %v751, %v753
        %v755 = vrot.slane %v741, %v754
        %v756 = vcombine.high %v748, %v748
        %v757 = vcombine.high %v755, %v755
        %v758 = vcombine.high %v294, %v294
        %v760 = vunpack.c.l.s4 1983009808
        %v761 = vunpack.c.0.s8 %v760
        %v762 = vlaneseq
        %v763 = vshrl.u32 %v762, 7
        %v764 = vsub.s32 %v761, %v763
        %v765 = vrot.slane %v294, %v764
        %v767 = vunpack.c.l.s4 1983009808
        %v768 = vunpack.c.0.s8 %v767
        %v769 = vlaneseq
        %v770 = vshrl.u32 %v769, 7
        %v771 = vsub.s32 %v768, %v770
        %v772 = vrot.slane %v758, %v771
        %v773 = vcombine.high %v765, %v765
        %v774 = vcombine.high %v772, %v772
        %v775 = vcombine.high %v295, %v295
        %v777 = vunpack.c.l.s4 1983009808
        %v778 = vunpack.c.0.s8 %v777
        %v779 = vlaneseq
        %v780 = vshrl.u32 %v779, 7
        %v781 = vsub.s32 %v778, %v780
        %v782 = vrot.slane %v295, %v781
        %v784 = vunpack.c.l.s4 1983009808
        %v785 = vunpack.c.0.s8 %v784
        %v786 = vlaneseq
        %v787 = vshrl.u32 %v786, 7
        %v788 = vsub.s32 %v785, %v787
        %v789 = vrot.slane %v775, %v788
        %v790 = vcombine.high %v782, %v782
        %v791 = vcombine.high %v789, %v789
        %v792 = vcombine.high %v296, %v296
        %v794 = vunpack.c.l.s4 1983009808
        %v795 = vunpack.c.0.s8 %v794
        %v796 = vlaneseq
        %v797 = vshrl.u32 %v796, 7
        %v798 = vsub.s32 %v795, %v797
        %v799 = vrot.slane %v296, %v798
        %v801 = vunpack.c.l.s4 1983009808
        %v802 = vunpack.c.0.s8 %v801
        %v803 = vlaneseq
        %v804 = vshrl.u32 %v803, 7
        %v805 = vsub.s32 %v802, %v804
        %v806 = vrot.slane %v792, %v805
        %v807 = vcombine.high %v799, %v799
        %v808 = vcombine.high %v806, %v806
        %v809 = vcombine.high %v297, %v297
        %v811 = vunpack.c.l.s4 1983009808
        %v812 = vunpack.c.0.s8 %v811
        %v813 = vlaneseq
        %v814 = vshrl.u32 %v813, 7
        %v815 = vsub.s32 %v812, %v814
        %v816 = vrot.slane %v297, %v815
        %v818 = vunpack.c.l.s4 1983009808
        %v819 = vunpack.c.0.s8 %v818
        %v820 = vlaneseq
        %v821 = vshrl.u32 %v820, 7
        %v822 = vsub.s32 %v819, %v821
        %v823 = vrot.slane %v809, %v822
        %v824 = vcombine.high %v816, %v816
        %v825 = vcombine.high %v823, %v823
        %v826 = vcombine.high %v298, %v298
        %v828 = vunpack.c.l.s4 1983009808
        %v829 = vunpack.c.0.s8 %v828
        %v830 = vlaneseq
        %v831 = vshrl.u32 %v830, 7
        %v832 = vsub.s32 %v829, %v831
        %v833 = vrot.slane %v298, %v832
        %v835 = vunpack.c.l.s4 1983009808
        %v836 = vunpack.c.0.s8 %v835
        %v837 = vlaneseq
        %v838 = vshrl.u32 %v837, 7
        %v839 = vsub.s32 %v836, %v838
        %v840 = vrot.slane %v826, %v839
        %v841 = vcombine.high %v833, %v833
        %v842 = vcombine.high %v840, %v840
        %v843 = vcombine.high %v299, %v299
        %v845 = vunpack.c.l.s4 1983009808
        %v846 = vunpack.c.0.s8 %v845
        %v847 = vlaneseq
        %v848 = vshrl.u32 %v847, 7
        %v849 = vsub.s32 %v846, %v848
        %v850 = vrot.slane %v299, %v849
        %v852 = vunpack.c.l.s4 1983009808
        %v853 = vunpack.c.0.s8 %v852
        %v854 = vlaneseq
        %v855 = vshrl.u32 %v854, 7
        %v856 = vsub.s32 %v853, %v855
        %v857 = vrot.slane %v843, %v856
        %v858 = vcombine.high %v850, %v850
        %v859 = vcombine.high %v857, %v857
        %v860 = vcombine.high %v300, %v300
        %v862 = vunpack.c.l.s4 1983009808
        %v863 = vunpack.c.0.s8 %v862
        %v864 = vlaneseq
        %v865 = vshrl.u32 %v864, 7
        %v866 = vsub.s32 %v863, %v865
        %v867 = vrot.slane %v300, %v866
        %v869 = vunpack.c.l.s4 1983009808
        %v870 = vunpack.c.0.s8 %v869
        %v871 = vlaneseq
        %v872 = vshrl.u32 %v871, 7
        %v873 = vsub.s32 %v870, %v872
        %v874 = vrot.slane %v860, %v873
        %v875 = vcombine.high %v867, %v867
        %v876 = vcombine.high %v874, %v874
        %v1005 = vrot.slane %v340, 7
        %v1006 = vrot.slane %v1005, 2
        %v1007 = vrot.slane %v348, 7
        %v1008 = vrot.slane %v1007, 2
        %v1009 = vrot.slane %v347, 7
        %v1010 = vrot.slane %v1009, 2
        %v1011 = vrot.slane %v349, 7
        %v1012 = vrot.slane %v1011, 2
        %v1013 = vrot.slane %v357, 7
        %v1014 = vrot.slane %v1013, 2
        %v1015 = vrot.slane %v365, 7
        %v1016 = vrot.slane %v1015, 2
        %v1017 = vrot.slane %v364, 7
        %v1018 = vrot.slane %v1017, 2
        %v1019 = vrot.slane %v366, 7
        %v1020 = vrot.slane %v1019, 2
        %v1021 = vrot.slane %v374, 7
        %v1022 = vrot.slane %v1021, 2
        %v1023 = vrot.slane %v382, 7
        %v1024 = vrot.slane %v1023, 2
        %v1025 = vrot.slane %v381, 7
        %v1026 = vrot.slane %v1025, 2
        %v1027 = vrot.slane %v383, 7
        %v1028 = vrot.slane %v1027, 2
        %v1029 = vrot.slane %v391, 7
        %v1030 = vrot.slane %v1029, 2
        %v1031 = vrot.slane %v399, 7
        %v1032 = vrot.slane %v1031, 2
        %v1033 = vrot.slane %v398, 7
        %v1034 = vrot.slane %v1033, 2
        %v1035 = vrot.slane %v400, 7
        %v1036 = vrot.slane %v1035, 2
        %v1037 = vrot.slane %v408, 7
        %v1038 = vrot.slane %v1037, 2
        %v1039 = vrot.slane %v416, 7
        %v1040 = vrot.slane %v1039, 2
        %v1041 = vrot.slane %v415, 7
        %v1042 = vrot.slane %v1041, 2
        %v1043 = vrot.slane %v417, 7
        %v1044 = vrot.slane %v1043, 2
        %v1045 = vrot.slane %v425, 7
        %v1046 = vrot.slane %v1045, 2
        %v1047 = vrot.slane %v433, 7
        %v1048 = vrot.slane %v1047, 2
        %v1049 = vrot.slane %v432, 7
        %v1050 = vrot.slane %v1049, 2
        %v1051 = vrot.slane %v434, 7
        %v1052 = vrot.slane %v1051, 2
        %v1053 = vrot.slane %v442, 7
        %v1054 = vrot.slane %v1053, 2
        %v1055 = vrot.slane %v450, 7
        %v1056 = vrot.slane %v1055, 2
        %v1057 = vrot.slane %v449, 7
        %v1058 = vrot.slane %v1057, 2
        %v1059 = vrot.slane %v451, 7
        %v1060 = vrot.slane %v1059, 2
        %v1061 = vrot.slane %v459, 7
        %v1062 = vrot.slane %v1061, 2
        %v1063 = vrot.slane %v467, 7
        %v1064 = vrot.slane %v1063, 2
        %v1065 = vrot.slane %v466, 7
        %v1066 = vrot.slane %v1065, 2
        %v1067 = vrot.slane %v468, 7
        %v1068 = vrot.slane %v1067, 2
        %v1069 = vrot.slane %v476, 7
        %v1070 = vrot.slane %v1069, 2
        %v1071 = vrot.slane %v484, 7
        %v1072 = vrot.slane %v1071, 2
        %v1073 = vrot.slane %v483, 7
        %v1074 = vrot.slane %v1073, 2
        %v1075 = vrot.slane %v485, 7
        %v1076 = vrot.slane %v1075, 2
        %v1077 = vrot.slane %v493, 7
        %v1078 = vrot.slane %v1077, 2
        %v1079 = vrot.slane %v501, 7
        %v1080 = vrot.slane %v1079, 2
        %v1081 = vrot.slane %v500, 7
        %v1082 = vrot.slane %v1081, 2
        %v1083 = vrot.slane %v502, 7
        %v1084 = vrot.slane %v1083, 2
        %v1085 = vrot.slane %v510, 7
        %v1086 = vrot.slane %v1085, 2
        %v1087 = vrot.slane %v518, 7
        %v1088 = vrot.slane %v1087, 2
        %v1089 = vrot.slane %v517, 7
        %v1090 = vrot.slane %v1089, 2
        %v1091 = vrot.slane %v519, 7
        %v1092 = vrot.slane %v1091, 2
        %v1093 = vrot.slane %v527, 7
        %v1094 = vrot.slane %v1093, 2
        %v1095 = vrot.slane %v535, 7
        %v1096 = vrot.slane %v1095, 2
        %v1097 = vrot.slane %v534, 7
        %v1098 = vrot.slane %v1097, 2
        %v1099 = vrot.slane %v536, 7
        %v1100 = vrot.slane %v1099, 2
        %v1101 = vrot.slane %v544, 7
        %v1102 = vrot.slane %v1101, 2
        %v1103 = vrot.slane %v552, 7
        %v1104 = vrot.slane %v1103, 2
        %v1105 = vrot.slane %v551, 7
        %v1106 = vrot.slane %v1105, 2
        %v1107 = vrot.slane %v553, 7
        %v1108 = vrot.slane %v1107, 2
        %v1109 = vrot.slane %v561, 7
        %v1110 = vrot.slane %v1109, 2
        %v1111 = vrot.slane %v569, 7
        %v1112 = vrot.slane %v1111, 2
        %v1113 = vrot.slane %v568, 7
        %v1114 = vrot.slane %v1113, 2
        %v1115 = vrot.slane %v570, 7
        %v1116 = vrot.slane %v1115, 2
        %v1117 = vrot.slane %v578, 7
        %v1118 = vrot.slane %v1117, 2
        %v1119 = vrot.slane %v586, 7
        %v1120 = vrot.slane %v1119, 2
        %v1121 = vrot.slane %v585, 7
        %v1122 = vrot.slane %v1121, 2
        %v1123 = vrot.slane %v587, 7
        %v1124 = vrot.slane %v1123, 2
        %v1125 = vrot.slane %v595, 7
        %v1126 = vrot.slane %v1125, 2
        %v1127 = vrot.slane %v603, 7
        %v1128 = vrot.slane %v1127, 2
        %v1129 = vrot.slane %v602, 7
        %v1130 = vrot.slane %v1129, 2
        %v1131 = vrot.slane %v604, 7
        %v1132 = vrot.slane %v1131, 2
        %v1133 = vrot.slane %v612, 7
        %v1134 = vrot.slane %v1133, 2
        %v1135 = vrot.slane %v620, 7
        %v1136 = vrot.slane %v1135, 2
        %v1137 = vrot.slane %v619, 7
        %v1138 = vrot.slane %v1137, 2
        %v1139 = vrot.slane %v621, 7
        %v1140 = vrot.slane %v1139, 2
        %v1141 = vrot.slane %v629, 7
        %v1142 = vrot.slane %v1141, 2
        %v1143 = vrot.slane %v637, 7
        %v1144 = vrot.slane %v1143, 2
        %v1145 = vrot.slane %v636, 7
        %v1146 = vrot.slane %v1145, 2
        %v1147 = vrot.slane %v638, 7
        %v1148 = vrot.slane %v1147, 2
        %v1149 = vrot.slane %v646, 7
        %v1150 = vrot.slane %v1149, 2
        %v1151 = vrot.slane %v654, 7
        %v1152 = vrot.slane %v1151, 2
        %v1153 = vrot.slane %v653, 7
        %v1154 = vrot.slane %v1153, 2
        %v1155 = vrot.slane %v655, 7
        %v1156 = vrot.slane %v1155, 2
        %v1157 = vrot.slane %v663, 7
        %v1158 = vrot.slane %v1157, 2
        %v1159 = vrot.slane %v671, 7
        %v1160 = vrot.slane %v1159, 2
        %v1161 = vrot.slane %v670, 7
        %v1162 = vrot.slane %v1161, 2
        %v1163 = vrot.slane %v672, 7
        %v1164 = vrot.slane %v1163, 2
        %v1165 = vrot.slane %v680, 7
        %v1166 = vrot.slane %v1165, 2
        %v1167 = vrot.slane %v688, 7
        %v1168 = vrot.slane %v1167, 2
        %v1169 = vrot.slane %v687, 7
        %v1170 = vrot.slane %v1169, 2
        %v1171 = vrot.slane %v689, 7
        %v1172 = vrot.slane %v1171, 2
        %v1173 = vrot.slane %v697, 7
        %v1174 = vrot.slane %v1173, 2
        %v1175 = vrot.slane %v705, 7
        %v1176 = vrot.slane %v1175, 2
        %v1177 = vrot.slane %v704, 7
        %v1178 = vrot.slane %v1177, 2
        %v1179 = vrot.slane %v706, 7
        %v1180 = vrot.slane %v1179, 2
        %v1181 = vrot.slane %v714, 7
        %v1182 = vrot.slane %v1181, 2
        %v1183 = vrot.slane %v722, 7
        %v1184 = vrot.slane %v1183, 2
        %v1185 = vrot.slane %v721, 7
        %v1186 = vrot.slane %v1185, 2
        %v1187 = vrot.slane %v723, 7
        %v1188 = vrot.slane %v1187, 2
        %v1189 = vrot.slane %v731, 7
        %v1190 = vrot.slane %v1189, 2
        %v1191 = vrot.slane %v739, 7
        %v1192 = vrot.slane %v1191, 2
        %v1193 = vrot.slane %v738, 7
        %v1194 = vrot.slane %v1193, 2
        %v1195 = vrot.slane %v740, 7
        %v1196 = vrot.slane %v1195, 2
        %v1197 = vrot.slane %v748, 7
        %v1198 = vrot.slane %v1197, 2
        %v1199 = vrot.slane %v756, 7
        %v1200 = vrot.slane %v1199, 2
        %v1201 = vrot.slane %v755, 7
        %v1202 = vrot.slane %v1201, 2
        %v1203 = vrot.slane %v757, 7
        %v1204 = vrot.slane %v1203, 2
        %v1205 = vrot.slane %v765, 7
        %v1206 = vrot.slane %v1205, 2
        %v1207 = vrot.slane %v773, 7
        %v1208 = vrot.slane %v1207, 2
        %v1209 = vrot.slane %v772, 7
        %v1210 = vrot.slane %v1209, 2
        %v1211 = vrot.slane %v774, 7
        %v1212 = vrot.slane %v1211, 2
        %v1213 = vrot.slane %v782, 7
        %v1214 = vrot.slane %v1213, 2
        %v1215 = vrot.slane %v790, 7
        %v1216 = vrot.slane %v1215, 2
        %v1217 = vrot.slane %v789, 7
        %v1218 = vrot.slane %v1217, 2
        %v1219 = vrot.slane %v791, 7
        %v1220 = vrot.slane %v1219, 2
        %v1221 = vrot.slane %v799, 7
        %v1222 = vrot.slane %v1221, 2
        %v1223 = vrot.slane %v807, 7
        %v1224 = vrot.slane %v1223, 2
        %v1225 = vrot.slane %v806, 7
        %v1226 = vrot.slane %v1225, 2
        %v1227 = vrot.slane %v808, 7
        %v1228 = vrot.slane %v1227, 2
        %v1229 = vrot.slane %v816, 7
        %v1230 = vrot.slane %v1229, 2
        %v1231 = vrot.slane %v824, 7
        %v1232 = vrot.slane %v1231, 2
        %v1233 = vrot.slane %v823, 7
        %v1234 = vrot.slane %v1233, 2
        %v1235 = vrot.slane %v825, 7
        %v1236 = vrot.slane %v1235, 2
        %v1237 = vrot.slane %v833, 7
        %v1238 = vrot.slane %v1237, 2
        %v1239 = vrot.slane %v841, 7
        %v1240 = vrot.slane %v1239, 2
        %v1241 = vrot.slane %v840, 7
        %v1242 = vrot.slane %v1241, 2
        %v1243 = vrot.slane %v842, 7
        %v1244 = vrot.slane %v1243, 2
        %v1245 = vrot.slane %v850, 7
        %v1246 = vrot.slane %v1245, 2
        %v1247 = vrot.slane %v858, 7
        %v1248 = vrot.slane %v1247, 2
        %v1249 = vrot.slane %v857, 7
        %v1250 = vrot.slane %v1249, 2
        %v1251 = vrot.slane %v859, 7
        %v1252 = vrot.slane %v1251, 2
        %v1253 = vrot.slane %v867, 7
        %v1254 = vrot.slane %v1253, 2
        %v1255 = vrot.slane %v875, 7
        %v1256 = vrot.slane %v1255, 2
        %v1257 = vrot.slane %v874, 7
        %v1258 = vrot.slane %v1257, 2
        %v1259 = vrot.slane %v876, 7
        %v1260 = vrot.slane %v1259, 2
        %v1389 = vmax.f32 %v340, %v1006
        %v1390 = vmax.f32 %v348, %v1008
        %v1391 = vmax.f32 %v347, %v1010
        %v1392 = vmax.f32 %v349, %v1012
        %v1393 = vmax.f32 %v357, %v1014
        %v1394 = vmax.f32 %v365, %v1016
        %v1395 = vmax.f32 %v364, %v1018
        %v1396 = vmax.f32 %v366, %v1020
        %v1397 = vmax.f32 %v374, %v1022
        %v1398 = vmax.f32 %v382, %v1024
        %v1399 = vmax.f32 %v381, %v1026
        %v1400 = vmax.f32 %v383, %v1028
        %v1401 = vmax.f32 %v391, %v1030
        %v1402 = vmax.f32 %v399, %v1032
        %v1403 = vmax.f32 %v398, %v1034
        %v1404 = vmax.f32 %v400, %v1036
        %v1405 = vmax.f32 %v408, %v1038
        %v1406 = vmax.f32 %v416, %v1040
        %v1407 = vmax.f32 %v415, %v1042
        %v1408 = vmax.f32 %v417, %v1044
        %v1409 = vmax.f32 %v425, %v1046
        %v1410 = vmax.f32 %v433, %v1048
        %v1411 = vmax.f32 %v432, %v1050
        %v1412 = vmax.f32 %v434, %v1052
        %v1413 = vmax.f32 %v442, %v1054
        %v1414 = vmax.f32 %v450, %v1056
        %v1415 = vmax.f32 %v449, %v1058
        %v1416 = vmax.f32 %v451, %v1060
        %v1417 = vmax.f32 %v459, %v1062
        %v1418 = vmax.f32 %v467, %v1064
        %v1419 = vmax.f32 %v466, %v1066
        %v1420 = vmax.f32 %v468, %v1068
        %v1421 = vmax.f32 %v476, %v1070
        %v1422 = vmax.f32 %v484, %v1072
        %v1423 = vmax.f32 %v483, %v1074
        %v1424 = vmax.f32 %v485, %v1076
        %v1425 = vmax.f32 %v493, %v1078
        %v1426 = vmax.f32 %v501, %v1080
        %v1427 = vmax.f32 %v500, %v1082
        %v1428 = vmax.f32 %v502, %v1084
        %v1429 = vmax.f32 %v510, %v1086
        %v1430 = vmax.f32 %v518, %v1088
        %v1431 = vmax.f32 %v517, %v1090
        %v1432 = vmax.f32 %v519, %v1092
        %v1433 = vmax.f32 %v527, %v1094
        %v1434 = vmax.f32 %v535, %v1096
        %v1435 = vmax.f32 %v534, %v1098
        %v1436 = vmax.f32 %v536, %v1100
        %v1437 = vmax.f32 %v544, %v1102
        %v1438 = vmax.f32 %v552, %v1104
        %v1439 = vmax.f32 %v551, %v1106
        %v1440 = vmax.f32 %v553, %v1108
        %v1441 = vmax.f32 %v561, %v1110
        %v1442 = vmax.f32 %v569, %v1112
        %v1443 = vmax.f32 %v568, %v1114
        %v1444 = vmax.f32 %v570, %v1116
        %v1445 = vmax.f32 %v578, %v1118
        %v1446 = vmax.f32 %v586, %v1120
        %v1447 = vmax.f32 %v585, %v1122
        %v1448 = vmax.f32 %v587, %v1124
        %v1449 = vmax.f32 %v595, %v1126
        %v1450 = vmax.f32 %v603, %v1128
        %v1451 = vmax.f32 %v602, %v1130
        %v1452 = vmax.f32 %v604, %v1132
        %v1453 = vmax.f32 %v612, %v1134
        %v1454 = vmax.f32 %v620, %v1136
        %v1455 = vmax.f32 %v619, %v1138
        %v1456 = vmax.f32 %v621, %v1140
        %v1457 = vmax.f32 %v629, %v1142
        %v1458 = vmax.f32 %v637, %v1144
        %v1459 = vmax.f32 %v636, %v1146
        %v1460 = vmax.f32 %v638, %v1148
        %v1461 = vmax.f32 %v646, %v1150
        %v1462 = vmax.f32 %v654, %v1152
        %v1463 = vmax.f32 %v653, %v1154
        %v1464 = vmax.f32 %v655, %v1156
        %v1465 = vmax.f32 %v663, %v1158
        %v1466 = vmax.f32 %v671, %v1160
        %v1467 = vmax.f32 %v670, %v1162
        %v1468 = vmax.f32 %v672, %v1164
        %v1469 = vmax.f32 %v680, %v1166
        %v1470 = vmax.f32 %v688, %v1168
        %v1471 = vmax.f32 %v687, %v1170
        %v1472 = vmax.f32 %v689, %v1172
        %v1473 = vmax.f32 %v697, %v1174
        %v1474 = vmax.f32 %v705, %v1176
        %v1475 = vmax.f32 %v704, %v1178
        %v1476 = vmax.f32 %v706, %v1180
        %v1477 = vmax.f32 %v714, %v1182
        %v1478 = vmax.f32 %v722, %v1184
        %v1479 = vmax.f32 %v721, %v1186
        %v1480 = vmax.f32 %v723, %v1188
        %v1481 = vmax.f32 %v731, %v1190
        %v1482 = vmax.f32 %v739, %v1192
        %v1483 = vmax.f32 %v738, %v1194
        %v1484 = vmax.f32 %v740, %v1196
        %v1485 = vmax.f32 %v748, %v1198
        %v1486 = vmax.f32 %v756, %v1200
        %v1487 = vmax.f32 %v755, %v1202
        %v1488 = vmax.f32 %v757, %v1204
        %v1489 = vmax.f32 %v765, %v1206
        %v1490 = vmax.f32 %v773, %v1208
        %v1491 = vmax.f32 %v772, %v1210
        %v1492 = vmax.f32 %v774, %v1212
        %v1493 = vmax.f32 %v782, %v1214
        %v1494 = vmax.f32 %v790, %v1216
        %v1495 = vmax.f32 %v789, %v1218
        %v1496 = vmax.f32 %v791, %v1220
        %v1497 = vmax.f32 %v799, %v1222
        %v1498 = vmax.f32 %v807, %v1224
        %v1499 = vmax.f32 %v806, %v1226
        %v1500 = vmax.f32 %v808, %v1228
        %v1501 = vmax.f32 %v816, %v1230
        %v1502 = vmax.f32 %v824, %v1232
        %v1503 = vmax.f32 %v823, %v1234
        %v1504 = vmax.f32 %v825, %v1236
        %v1505 = vmax.f32 %v833, %v1238
        %v1506 = vmax.f32 %v841, %v1240
        %v1507 = vmax.f32 %v840, %v1242
        %v1508 = vmax.f32 %v842, %v1244
        %v1509 = vmax.f32 %v850, %v1246
        %v1510 = vmax.f32 %v858, %v1248
        %v1511 = vmax.f32 %v857, %v1250
        %v1512 = vmax.f32 %v859, %v1252
        %v1513 = vmax.f32 %v867, %v1254
        %v1514 = vmax.f32 %v875, %v1256
        %v1515 = vmax.f32 %v874, %v1258
        %v1516 = vmax.f32 %v876, %v1260
        %v1517 = vmax.f32 %v1389, %v1397
        %v1518 = vmax.f32 %v1390, %v1398
        %v1519 = vmax.f32 %v1391, %v1399
        %v1520 = vmax.f32 %v1392, %v1400
        %v1521 = vmax.f32 %v1393, %v1401
        %v1522 = vmax.f32 %v1394, %v1402
        %v1523 = vmax.f32 %v1395, %v1403
        %v1524 = vmax.f32 %v1396, %v1404
        %v1525 = vmax.f32 %v1405, %v1413
        %v1526 = vmax.f32 %v1406, %v1414
        %v1527 = vmax.f32 %v1407, %v1415
        %v1528 = vmax.f32 %v1408, %v1416
        %v1529 = vmax.f32 %v1409, %v1417
        %v1530 = vmax.f32 %v1410, %v1418
        %v1531 = vmax.f32 %v1411, %v1419
        %v1532 = vmax.f32 %v1412, %v1420
        %v1533 = vmax.f32 %v1421, %v1429
        %v1534 = vmax.f32 %v1422, %v1430
        %v1535 = vmax.f32 %v1423, %v1431
        %v1536 = vmax.f32 %v1424, %v1432
        %v1537 = vmax.f32 %v1425, %v1433
        %v1538 = vmax.f32 %v1426, %v1434
        %v1539 = vmax.f32 %v1427, %v1435
        %v1540 = vmax.f32 %v1428, %v1436
        %v1541 = vmax.f32 %v1437, %v1445
        %v1542 = vmax.f32 %v1438, %v1446
        %v1543 = vmax.f32 %v1439, %v1447
        %v1544 = vmax.f32 %v1440, %v1448
        %v1545 = vmax.f32 %v1441, %v1449
        %v1546 = vmax.f32 %v1442, %v1450
        %v1547 = vmax.f32 %v1443, %v1451
        %v1548 = vmax.f32 %v1444, %v1452
        %v1549 = vmax.f32 %v1453, %v1461
        %v1550 = vmax.f32 %v1454, %v1462
        %v1551 = vmax.f32 %v1455, %v1463
        %v1552 = vmax.f32 %v1456, %v1464
        %v1553 = vmax.f32 %v1457, %v1465
        %v1554 = vmax.f32 %v1458, %v1466
        %v1555 = vmax.f32 %v1459, %v1467
        %v1556 = vmax.f32 %v1460, %v1468
        %v1557 = vmax.f32 %v1469, %v1477
        %v1558 = vmax.f32 %v1470, %v1478
        %v1559 = vmax.f32 %v1471, %v1479
        %v1560 = vmax.f32 %v1472, %v1480
        %v1561 = vmax.f32 %v1473, %v1481
        %v1562 = vmax.f32 %v1474, %v1482
        %v1563 = vmax.f32 %v1475, %v1483
        %v1564 = vmax.f32 %v1476, %v1484
        %v1565 = vmax.f32 %v1485, %v1493
        %v1566 = vmax.f32 %v1486, %v1494
        %v1567 = vmax.f32 %v1487, %v1495
        %v1568 = vmax.f32 %v1488, %v1496
        %v1569 = vmax.f32 %v1489, %v1497
        %v1570 = vmax.f32 %v1490, %v1498
        %v1571 = vmax.f32 %v1491, %v1499
        %v1572 = vmax.f32 %v1492, %v1500
        %v1573 = vmax.f32 %v1501, %v1509
        %v1574 = vmax.f32 %v1502, %v1510
        %v1575 = vmax.f32 %v1503, %v1511
        %v1576 = vmax.f32 %v1504, %v1512
        %v1577 = vmax.f32 %v1505, %v1513
        %v1578 = vmax.f32 %v1506, %v1514
        %v1579 = vmax.f32 %v1507, %v1515
        %v1580 = vmax.f32 %v1508, %v1516
        %1581 = vst [vmem:[#allocation2] sm:$0xff] 0.0
        %1582 = vst [vmem:[#allocation2 + $0x8] sm:$0x3] 0.0
        %1583 = vst [vmem:[#allocation2 + $0x10] sm:$0xff] 0.0
        %1584 = vst [vmem:[#allocation2 + $0x18] sm:$0x3] 0.0
        %1585 = vst [vmem:[#allocation2 + $0x20] sm:$0xff] 0.0
        %1586 = vst [vmem:[#allocation2 + $0x28] sm:$0x3] 0.0
        %1587 = vst [vmem:[#allocation2 + $0x30] sm:$0xff] 0.0
        %1588 = vst [vmem:[#allocation2 + $0x38] sm:$0x3] 0.0
        %1589 = vst [vmem:[#allocation2 + $0x40] sm:$0xff] 0.0
        %1590 = vst [vmem:[#allocation2 + $0x48] sm:$0x3] 0.0
        %1591 = vst [vmem:[#allocation2 + $0x50] sm:$0xff] 0.0
        %1592 = vst [vmem:[#allocation2 + $0x58] sm:$0x3] 0.0
        %1593 = vst [vmem:[#allocation2 + $0x60] sm:$0xff] 0.0
        %1594 = vst [vmem:[#allocation2 + $0x68] sm:$0x3] 0.0
        %1595 = vst [vmem:[#allocation2 + $0x70] sm:$0xff] 0.0
        %1596 = vst [vmem:[#allocation2 + $0x78] sm:$0x3] 0.0
        %1597 = vst [vmem:[#allocation2 + $0x80] sm:$0xff] 0.0
        %1598 = vst [vmem:[#allocation2 + $0x88] sm:$0x3] 0.0
        %1599 = vst [vmem:[#allocation2 + $0x90] sm:$0xff] 0.0
        %1600 = vst [vmem:[#allocation2 + $0x98] sm:$0x3] 0.0
        %v1665 = vlaneseq
        %v1666 = vshrl.u32 %v1665, 7
        %v1667 = vsub.s32 0, %v1666
        %v1668 = vrot.slane %v1517, %v1667
        %v1669 = vlaneseq
        %v1670 = vshrl.u32 %v1669, 7
        %v1671 = vsub.s32 0, %v1670
        %v1672 = vrot.slane %v1518, %v1671
        %v1673 = vlaneseq
        %v1674 = vshrl.u32 %v1673, 7
        %v1675 = vsub.s32 0, %v1674
        %v1676 = vrot.slane %v1519, %v1675
        %v1677 = vlaneseq
        %v1678 = vshrl.u32 %v1677, 7
        %v1679 = vsub.s32 0, %v1678
        %v1680 = vrot.slane %v1520, %v1679
        %v1681 = vlaneseq
        %v1682 = vshrl.u32 %v1681, 7
        %v1683 = vsub.s32 0, %v1682
        %v1684 = vrot.slane %v1521, %v1683
        %v1685 = vlaneseq
        %v1686 = vshrl.u32 %v1685, 7
        %v1687 = vsub.s32 0, %v1686
        %v1688 = vrot.slane %v1522, %v1687
        %v1689 = vlaneseq
        %v1690 = vshrl.u32 %v1689, 7
        %v1691 = vsub.s32 0, %v1690
        %v1692 = vrot.slane %v1523, %v1691
        %v1693 = vlaneseq
        %v1694 = vshrl.u32 %v1693, 7
        %v1695 = vsub.s32 0, %v1694
        %v1696 = vrot.slane %v1524, %v1695
        %v1697 = vlaneseq
        %v1698 = vshrl.u32 %v1697, 7
        %v1699 = vsub.s32 0, %v1698
        %v1700 = vrot.slane %v1525, %v1699
        %v1701 = vlaneseq
        %v1702 = vshrl.u32 %v1701, 7
        %v1703 = vsub.s32 0, %v1702
        %v1704 = vrot.slane %v1526, %v1703
        %v1705 = vlaneseq
        %v1706 = vshrl.u32 %v1705, 7
        %v1707 = vsub.s32 0, %v1706
        %v1708 = vrot.slane %v1527, %v1707
        %v1709 = vlaneseq
        %v1710 = vshrl.u32 %v1709, 7
        %v1711 = vsub.s32 0, %v1710
        %v1712 = vrot.slane %v1528, %v1711
        %v1713 = vlaneseq
        %v1714 = vshrl.u32 %v1713, 7
        %v1715 = vsub.s32 0, %v1714
        %v1716 = vrot.slane %v1529, %v1715
        %v1717 = vlaneseq
        %v1718 = vshrl.u32 %v1717, 7
        %v1719 = vsub.s32 0, %v1718
        %v1720 = vrot.slane %v1530, %v1719
        %v1721 = vlaneseq
        %v1722 = vshrl.u32 %v1721, 7
        %v1723 = vsub.s32 0, %v1722
        %v1724 = vrot.slane %v1531, %v1723
        %v1725 = vlaneseq
        %v1726 = vshrl.u32 %v1725, 7
        %v1727 = vsub.s32 0, %v1726
        %v1728 = vrot.slane %v1532, %v1727
        %v1729 = vlaneseq
        %v1730 = vshrl.u32 %v1729, 7
        %v1731 = vsub.s32 0, %v1730
        %v1732 = vrot.slane %v1533, %v1731
        %v1733 = vlaneseq
        %v1734 = vshrl.u32 %v1733, 7
        %v1735 = vsub.s32 0, %v1734
        %v1736 = vrot.slane %v1534, %v1735
        %v1737 = vlaneseq
        %v1738 = vshrl.u32 %v1737, 7
        %v1739 = vsub.s32 0, %v1738
        %v1740 = vrot.slane %v1535, %v1739
        %v1741 = vlaneseq
        %v1742 = vshrl.u32 %v1741, 7
        %v1743 = vsub.s32 0, %v1742
        %v1744 = vrot.slane %v1536, %v1743
        %v1745 = vlaneseq
        %v1746 = vshrl.u32 %v1745, 7
        %v1747 = vsub.s32 0, %v1746
        %v1748 = vrot.slane %v1537, %v1747
        %v1749 = vlaneseq
        %v1750 = vshrl.u32 %v1749, 7
        %v1751 = vsub.s32 0, %v1750
        %v1752 = vrot.slane %v1538, %v1751
        %v1753 = vlaneseq
        %v1754 = vshrl.u32 %v1753, 7
        %v1755 = vsub.s32 0, %v1754
        %v1756 = vrot.slane %v1539, %v1755
        %v1757 = vlaneseq
        %v1758 = vshrl.u32 %v1757, 7
        %v1759 = vsub.s32 0, %v1758
        %v1760 = vrot.slane %v1540, %v1759
        %v1761 = vlaneseq
        %v1762 = vshrl.u32 %v1761, 7
        %v1763 = vsub.s32 0, %v1762
        %v1764 = vrot.slane %v1541, %v1763
        %v1765 = vlaneseq
        %v1766 = vshrl.u32 %v1765, 7
        %v1767 = vsub.s32 0, %v1766
        %v1768 = vrot.slane %v1542, %v1767
        %v1769 = vlaneseq
        %v1770 = vshrl.u32 %v1769, 7
        %v1771 = vsub.s32 0, %v1770
        %v1772 = vrot.slane %v1543, %v1771
        %v1773 = vlaneseq
        %v1774 = vshrl.u32 %v1773, 7
        %v1775 = vsub.s32 0, %v1774
        %v1776 = vrot.slane %v1544, %v1775
        %v1777 = vlaneseq
        %v1778 = vshrl.u32 %v1777, 7
        %v1779 = vsub.s32 0, %v1778
        %v1780 = vrot.slane %v1545, %v1779
        %v1781 = vlaneseq
        %v1782 = vshrl.u32 %v1781, 7
        %v1783 = vsub.s32 0, %v1782
        %v1784 = vrot.slane %v1546, %v1783
        %v1785 = vlaneseq
        %v1786 = vshrl.u32 %v1785, 7
        %v1787 = vsub.s32 0, %v1786
        %v1788 = vrot.slane %v1547, %v1787
        %v1789 = vlaneseq
        %v1790 = vshrl.u32 %v1789, 7
        %v1791 = vsub.s32 0, %v1790
        %v1792 = vrot.slane %v1548, %v1791
        %v1793 = vlaneseq
        %v1794 = vshrl.u32 %v1793, 7
        %v1795 = vsub.s32 0, %v1794
        %v1796 = vrot.slane %v1549, %v1795
        %v1797 = vlaneseq
        %v1798 = vshrl.u32 %v1797, 7
        %v1799 = vsub.s32 0, %v1798
        %v1800 = vrot.slane %v1550, %v1799
        %v1801 = vlaneseq
        %v1802 = vshrl.u32 %v1801, 7
        %v1803 = vsub.s32 0, %v1802
        %v1804 = vrot.slane %v1551, %v1803
        %v1805 = vlaneseq
        %v1806 = vshrl.u32 %v1805, 7
        %v1807 = vsub.s32 0, %v1806
        %v1808 = vrot.slane %v1552, %v1807
        %v1809 = vlaneseq
        %v1810 = vshrl.u32 %v1809, 7
        %v1811 = vsub.s32 0, %v1810
        %v1812 = vrot.slane %v1553, %v1811
        %v1813 = vlaneseq
        %v1814 = vshrl.u32 %v1813, 7
        %v1815 = vsub.s32 0, %v1814
        %v1816 = vrot.slane %v1554, %v1815
        %v1817 = vlaneseq
        %v1818 = vshrl.u32 %v1817, 7
        %v1819 = vsub.s32 0, %v1818
        %v1820 = vrot.slane %v1555, %v1819
        %v1821 = vlaneseq
        %v1822 = vshrl.u32 %v1821, 7
        %v1823 = vsub.s32 0, %v1822
        %v1824 = vrot.slane %v1556, %v1823
        %v1825 = vlaneseq
        %v1826 = vshrl.u32 %v1825, 7
        %v1827 = vsub.s32 0, %v1826
        %v1828 = vrot.slane %v1557, %v1827
        %v1829 = vlaneseq
        %v1830 = vshrl.u32 %v1829, 7
        %v1831 = vsub.s32 0, %v1830
        %v1832 = vrot.slane %v1558, %v1831
        %v1833 = vlaneseq
        %v1834 = vshrl.u32 %v1833, 7
        %v1835 = vsub.s32 0, %v1834
        %v1836 = vrot.slane %v1559, %v1835
        %v1837 = vlaneseq
        %v1838 = vshrl.u32 %v1837, 7
        %v1839 = vsub.s32 0, %v1838
        %v1840 = vrot.slane %v1560, %v1839
        %v1841 = vlaneseq
        %v1842 = vshrl.u32 %v1841, 7
        %v1843 = vsub.s32 0, %v1842
        %v1844 = vrot.slane %v1561, %v1843
        %v1845 = vlaneseq
        %v1846 = vshrl.u32 %v1845, 7
        %v1847 = vsub.s32 0, %v1846
        %v1848 = vrot.slane %v1562, %v1847
        %v1849 = vlaneseq
        %v1850 = vshrl.u32 %v1849, 7
        %v1851 = vsub.s32 0, %v1850
        %v1852 = vrot.slane %v1563, %v1851
        %v1853 = vlaneseq
        %v1854 = vshrl.u32 %v1853, 7
        %v1855 = vsub.s32 0, %v1854
        %v1856 = vrot.slane %v1564, %v1855
        %v1857 = vlaneseq
        %v1858 = vshrl.u32 %v1857, 7
        %v1859 = vsub.s32 0, %v1858
        %v1860 = vrot.slane %v1565, %v1859
        %v1861 = vlaneseq
        %v1862 = vshrl.u32 %v1861, 7
        %v1863 = vsub.s32 0, %v1862
        %v1864 = vrot.slane %v1566, %v1863
        %v1865 = vlaneseq
        %v1866 = vshrl.u32 %v1865, 7
        %v1867 = vsub.s32 0, %v1866
        %v1868 = vrot.slane %v1567, %v1867
        %v1869 = vlaneseq
        %v1870 = vshrl.u32 %v1869, 7
        %v1871 = vsub.s32 0, %v1870
        %v1872 = vrot.slane %v1568, %v1871
        %v1873 = vlaneseq
        %v1874 = vshrl.u32 %v1873, 7
        %v1875 = vsub.s32 0, %v1874
        %v1876 = vrot.slane %v1569, %v1875
        %v1877 = vlaneseq
        %v1878 = vshrl.u32 %v1877, 7
        %v1879 = vsub.s32 0, %v1878
        %v1880 = vrot.slane %v1570, %v1879
        %v1881 = vlaneseq
        %v1882 = vshrl.u32 %v1881, 7
        %v1883 = vsub.s32 0, %v1882
        %v1884 = vrot.slane %v1571, %v1883
        %v1885 = vlaneseq
        %v1886 = vshrl.u32 %v1885, 7
        %v1887 = vsub.s32 0, %v1886
        %v1888 = vrot.slane %v1572, %v1887
        %v1889 = vlaneseq
        %v1890 = vshrl.u32 %v1889, 7
        %v1891 = vsub.s32 0, %v1890
        %v1892 = vrot.slane %v1573, %v1891
        %v1893 = vlaneseq
        %v1894 = vshrl.u32 %v1893, 7
        %v1895 = vsub.s32 0, %v1894
        %v1896 = vrot.slane %v1574, %v1895
        %v1897 = vlaneseq
        %v1898 = vshrl.u32 %v1897, 7
        %v1899 = vsub.s32 0, %v1898
        %v1900 = vrot.slane %v1575, %v1899
        %v1901 = vlaneseq
        %v1902 = vshrl.u32 %v1901, 7
        %v1903 = vsub.s32 0, %v1902
        %v1904 = vrot.slane %v1576, %v1903
        %v1905 = vlaneseq
        %v1906 = vshrl.u32 %v1905, 7
        %v1907 = vsub.s32 0, %v1906
        %v1908 = vrot.slane %v1577, %v1907
        %v1909 = vlaneseq
        %v1910 = vshrl.u32 %v1909, 7
        %v1911 = vsub.s32 0, %v1910
        %v1912 = vrot.slane %v1578, %v1911
        %v1913 = vlaneseq
        %v1914 = vshrl.u32 %v1913, 7
        %v1915 = vsub.s32 0, %v1914
        %v1916 = vrot.slane %v1579, %v1915
        %v1917 = vlaneseq
        %v1918 = vshrl.u32 %v1917, 7
        %v1919 = vsub.s32 0, %v1918
        %v1920 = vrot.slane %v1580, %v1919
        %vm1921 = vcmask 1041409
        %v1922 = vsel %vm1921, %v1672, %v1668
        %vm1923 = vcmask 1042434
        %v1924 = vsel %vm1923, %v1676, %v1922
        %vm1925 = vcmask 1043459
        %v1926 = vsel %vm1925, %v1680, %v1924
        %vm1927 = vcmask 1044484
        %v1928 = vsel %vm1927, %v1684, %v1926
        %vm1929 = vcmask 1045509
        %v1930 = vsel %vm1929, %v1688, %v1928
        %vm1931 = vcmask 1046534
        %v1932 = vsel %vm1931, %v1692, %v1930
        %vm1933 = vcmask 1047559
        %v1934 = vsel %vm1933, %v1696, %v1932
        %v1935 = vsel %vm1921, %v1704, %v1700
        %v1936 = vsel %vm1923, %v1708, %v1935
        %v1937 = vsel %vm1925, %v1712, %v1936
        %v1938 = vsel %vm1927, %v1716, %v1937
        %v1939 = vsel %vm1929, %v1720, %v1938
        %v1940 = vsel %vm1931, %v1724, %v1939
        %v1941 = vsel %vm1933, %v1728, %v1940
        %v1942 = vsel %vm1921, %v1736, %v1732
        %v1943 = vsel %vm1923, %v1740, %v1942
        %v1944 = vsel %vm1925, %v1744, %v1943
        %v1945 = vsel %vm1927, %v1748, %v1944
        %v1946 = vsel %vm1929, %v1752, %v1945
        %v1947 = vsel %vm1931, %v1756, %v1946
        %v1948 = vsel %vm1933, %v1760, %v1947
        %v1949 = vsel %vm1921, %v1768, %v1764
        %v1950 = vsel %vm1923, %v1772, %v1949
        %v1951 = vsel %vm1925, %v1776, %v1950
        %v1952 = vsel %vm1927, %v1780, %v1951
        %v1953 = vsel %vm1929, %v1784, %v1952
        %v1954 = vsel %vm1931, %v1788, %v1953
        %v1955 = vsel %vm1933, %v1792, %v1954
        %v1956 = vsel %vm1921, %v1800, %v1796
        %v1957 = vsel %vm1923, %v1804, %v1956
        %v1958 = vsel %vm1925, %v1808, %v1957
        %v1959 = vsel %vm1927, %v1812, %v1958
        %v1960 = vsel %vm1929, %v1816, %v1959
        %v1961 = vsel %vm1931, %v1820, %v1960
        %v1962 = vsel %vm1933, %v1824, %v1961
        %v1963 = vsel %vm1921, %v1832, %v1828
        %v1964 = vsel %vm1923, %v1836, %v1963
        %v1965 = vsel %vm1925, %v1840, %v1964
        %v1966 = vsel %vm1927, %v1844, %v1965
        %v1967 = vsel %vm1929, %v1848, %v1966
        %v1968 = vsel %vm1931, %v1852, %v1967
        %v1969 = vsel %vm1933, %v1856, %v1968
        %v1970 = vsel %vm1921, %v1864, %v1860
        %v1971 = vsel %vm1923, %v1868, %v1970
        %v1972 = vsel %vm1925, %v1872, %v1971
        %v1973 = vsel %vm1927, %v1876, %v1972
        %v1974 = vsel %vm1929, %v1880, %v1973
        %v1975 = vsel %vm1931, %v1884, %v1974
        %v1976 = vsel %vm1933, %v1888, %v1975
        %v1977 = vsel %vm1921, %v1896, %v1892
        %v1978 = vsel %vm1923, %v1900, %v1977
        %v1979 = vsel %vm1925, %v1904, %v1978
        %v1980 = vsel %vm1927, %v1908, %v1979
        %v1981 = vsel %vm1929, %v1912, %v1980
        %v1982 = vsel %vm1931, %v1916, %v1981
        %v1983 = vsel %vm1933, %v1920, %v1982
        %s1992 = scalar_lea.vmem [#allocation2], 16
        %1993 = vst [vmem:[%s1992 + $0x1] sm:$0xff] %v1934
        %1994 = vst [vmem:[%s1992 + $0x11] sm:$0xff] %v1941
        %1995 = vst [vmem:[%s1992 + $0x21] sm:$0xff] %v1948
        %1996 = vst [vmem:[%s1992 + $0x31] sm:$0xff] %v1955
        %1997 = vst [vmem:[%s1992 + $0x41] sm:$0xff] %v1962
        %1998 = vst [vmem:[%s1992 + $0x51] sm:$0xff] %v1969
        %1999 = vst [vmem:[%s1992 + $0x61] sm:$0xff] %v1976
        %2000 = vst [vmem:[%s1992 + $0x71] sm:$0xff] %v1983
        %v2001 = vld [vmem:[#allocation2] sm:$0xff]
        %v2002 = vld [vmem:[#allocation2 + $0x8] sm:$0x3]
        %v2003 = vld [vmem:[#allocation2 + $0x10] sm:$0xff]
        %v2004 = vld [vmem:[#allocation2 + $0x18] sm:$0x3]
        %v2005 = vld [vmem:[#allocation2 + $0x20] sm:$0xff]
        %v2006 = vld [vmem:[#allocation2 + $0x28] sm:$0x3]
        %v2007 = vld [vmem:[#allocation2 + $0x30] sm:$0xff]
        %v2008 = vld [vmem:[#allocation2 + $0x38] sm:$0x3]
        %v2009 = vld [vmem:[#allocation2 + $0x40] sm:$0xff]
        %v2010 = vld [vmem:[#allocation2 + $0x48] sm:$0x3]
        %v2011 = vld [vmem:[#allocation2 + $0x50] sm:$0xff]
        %v2012 = vld [vmem:[#allocation2 + $0x58] sm:$0x3]
        %v2013 = vld [vmem:[#allocation2 + $0x60] sm:$0xff]
        %v2014 = vld [vmem:[#allocation2 + $0x68] sm:$0x3]
        %v2015 = vld [vmem:[#allocation2 + $0x70] sm:$0xff]
        %v2016 = vld [vmem:[#allocation2 + $0x78] sm:$0x3]
        %v2017 = vld [vmem:[#allocation2 + $0x80] sm:$0xff]
        %v2018 = vld [vmem:[#allocation2 + $0x88] sm:$0x3]
        %v2019 = vld [vmem:[#allocation2 + $0x90] sm:$0xff]
        %v2020 = vld [vmem:[#allocation2 + $0x98] sm:$0x3]
        %vm2037 = vcmask 1046528
        %v2038 = vrot.slane %v2001, 1
        %v2039 = vrot.slane %v2002, 1
        %v2040 = vsel %vm2037, %v2038, %v2039
        %v2041 = vrot.slane %v2003, 1
        %v2042 = vrot.slane %v2004, 1
        %v2043 = vsel %vm2037, %v2041, %v2042
        %v2044 = vrot.slane %v2005, 1
        %v2045 = vrot.slane %v2006, 1
        %v2046 = vsel %vm2037, %v2044, %v2045
        %v2047 = vrot.slane %v2007, 1
        %v2048 = vrot.slane %v2008, 1
        %v2049 = vsel %vm2037, %v2047, %v2048
        %v2050 = vrot.slane %v2009, 1
        %v2051 = vrot.slane %v2010, 1
        %v2052 = vsel %vm2037, %v2050, %v2051
        %v2053 = vrot.slane %v2011, 1
        %v2054 = vrot.slane %v2012, 1
        %v2055 = vsel %vm2037, %v2053, %v2054
        %v2056 = vrot.slane %v2013, 1
        %v2057 = vrot.slane %v2014, 1
        %v2058 = vsel %vm2037, %v2056, %v2057
        %v2059 = vrot.slane %v2015, 1
        %v2060 = vrot.slane %v2016, 1
        %v2061 = vsel %vm2037, %v2059, %v2060
        %vm2070 = vcmask 1045504
        %v2071 = vrot.slane %v2001, 2
        %v2072 = vrot.slane %v2002, 2
        %v2073 = vsel %vm2070, %v2071, %v2072
        %v2074 = vrot.slane %v2003, 2
        %v2075 = vrot.slane %v2004, 2
        %v2076 = vsel %vm2070, %v2074, %v2075
        %v2077 = vrot.slane %v2005, 2
        %v2078 = vrot.slane %v2006, 2
        %v2079 = vsel %vm2070, %v2077, %v2078
        %v2080 = vrot.slane %v2007, 2
        %v2081 = vrot.slane %v2008, 2
        %v2082 = vsel %vm2070, %v2080, %v2081
        %v2083 = vrot.slane %v2009, 2
        %v2084 = vrot.slane %v2010, 2
        %v2085 = vsel %vm2070, %v2083, %v2084
        %v2086 = vrot.slane %v2011, 2
        %v2087 = vrot.slane %v2012, 2
        %v2088 = vsel %vm2070, %v2086, %v2087
        %v2089 = vrot.slane %v2013, 2
        %v2090 = vrot.slane %v2014, 2
        %v2091 = vsel %vm2070, %v2089, %v2090
        %v2092 = vrot.slane %v2015, 2
        %v2093 = vrot.slane %v2016, 2
        %v2094 = vsel %vm2070, %v2092, %v2093
        %v2105 = vrot.slane %v2017, 1
        %v2106 = vrot.slane %v2018, 1
        %v2107 = vsel %vm2037, %v2105, %v2106
        %v2109 = vrot.slane %v2017, 2
        %v2110 = vrot.slane %v2018, 2
        %v2111 = vsel %vm2070, %v2109, %v2110
        %v2115 = vrot.slane %v2019, 1
        %v2116 = vrot.slane %v2020, 1
        %v2117 = vsel %vm2037, %v2115, %v2116
        %v2119 = vrot.slane %v2019, 2
        %v2120 = vrot.slane %v2020, 2
        %v2121 = vsel %vm2070, %v2119, %v2120
        %v2123 = vld [vmem:[#allocation6] sm:$0xff]
        %v2124 = vld [vmem:[#allocation6 + $0x8] sm:$0xff]
        %v2125 = vld [vmem:[#allocation6 + $0x10] sm:$0xff]
        %v2126 = vld [vmem:[#allocation6 + $0x18] sm:$0xff]
        %v2127 = vld [vmem:[#allocation6 + $0x20] sm:$0xff]
        %v2128 = vld [vmem:[#allocation6 + $0x28] sm:$0xff]
        %v2129 = vld [vmem:[#allocation6 + $0x30] sm:$0xff]
        %v2130 = vld [vmem:[#allocation6 + $0x38] sm:$0xff]
        %v2131 = vld [vmem:[#allocation6 + $0x40] sm:$0xff]
        %v2132 = vld [vmem:[#allocation6 + $0x48] sm:$0xff]
        %v2133 = vld [vmem:[#allocation6 + $0x50] sm:$0xff]
        %v2134 = vld [vmem:[#allocation6 + $0x58] sm:$0xff]
        %v2135 = vld [vmem:[#allocation6 + $0x60] sm:$0xff]
        %v2136 = vld [vmem:[#allocation6 + $0x68] sm:$0xff]
        %v2137 = vld [vmem:[#allocation6 + $0x70] sm:$0xff]
        %v2138 = vld [vmem:[#allocation6 + $0x78] sm:$0xff]
        %v2139 = vld [vmem:[#allocation6 + $0x80] sm:$0xff]
        %v2140 = vld [vmem:[#allocation6 + $0x88] sm:$0xff]
        %v2141 = vld [vmem:[#allocation6 + $0x90] sm:$0xff]
        %v2142 = vld [vmem:[#allocation6 + $0x98] sm:$0xff]
        %v2143 = vld [vmem:[#allocation6 + $0xa0] sm:$0xff]
        %v2144 = vld [vmem:[#allocation6 + $0xa8] sm:$0xff]
        %v2145 = vld [vmem:[#allocation6 + $0xb0] sm:$0xff]
        %v2146 = vld [vmem:[#allocation6 + $0xb8] sm:$0xff]
        %v2147 = vld [vmem:[#allocation6 + $0xc0] sm:$0xff]
        %v2148 = vld [vmem:[#allocation6 + $0xc8] sm:$0xff]
        %v2149 = vld [vmem:[#allocation6 + $0xd0] sm:$0xff]
        %v2150 = vld [vmem:[#allocation6 + $0xd8] sm:$0xff]
        %v2151 = vld [vmem:[#allocation6 + $0xe0] sm:$0xff]
        %v2152 = vld [vmem:[#allocation6 + $0xe8] sm:$0xff]
        %v2153 = vld [vmem:[#allocation6 + $0xf0] sm:$0xff]
        %v2154 = vld [vmem:[#allocation6 + $0xf8] sm:$0xff]
        %v2155 = vld [vmem:[#allocation6 + $0x100] sm:$0xff]
        %v2156 = vld [vmem:[#allocation6 + $0x108] sm:$0xff]
        %v2157 = vld [vmem:[#allocation6 + $0x110] sm:$0xff]
        %v2158 = vld [vmem:[#allocation6 + $0x118] sm:$0xff]
        %v2159 = vld [vmem:[#allocation6 + $0x120] sm:$0xff]
        %v2160 = vld [vmem:[#allocation6 + $0x128] sm:$0xff]
        %v2161 = vld [vmem:[#allocation6 + $0x130] sm:$0xff]
        %v2162 = vld [vmem:[#allocation6 + $0x138] sm:$0xff]
        %v2163 = vld [vmem:[#allocation6 + $0x140] sm:$0xff]
        %v2164 = vld [vmem:[#allocation6 + $0x148] sm:$0xff]
        %v2165 = vld [vmem:[#allocation6 + $0x150] sm:$0xff]
        %v2166 = vld [vmem:[#allocation6 + $0x158] sm:$0xff]
        %v2167 = vld [vmem:[#allocation6 + $0x160] sm:$0xff]
        %v2168 = vld [vmem:[#allocation6 + $0x168] sm:$0xff]
        %v2169 = vld [vmem:[#allocation6 + $0x170] sm:$0xff]
        %v2170 = vld [vmem:[#allocation6 + $0x178] sm:$0xff]
        %v2171 = vld [vmem:[#allocation6 + $0x180] sm:$0xff]
        %v2172 = vld [vmem:[#allocation6 + $0x188] sm:$0xff]
        %v2173 = vld [vmem:[#allocation6 + $0x190] sm:$0xff]
        %v2174 = vld [vmem:[#allocation6 + $0x198] sm:$0xff]
        %v2175 = vld [vmem:[#allocation6 + $0x1a0] sm:$0xff]
        %v2176 = vld [vmem:[#allocation6 + $0x1a8] sm:$0xff]
        %v2177 = vld [vmem:[#allocation6 + $0x1b0] sm:$0xff]
        %v2178 = vld [vmem:[#allocation6 + $0x1b8] sm:$0xff]
        %v2179 = vld [vmem:[#allocation6 + $0x1c0] sm:$0xff]
        %v2180 = vld [vmem:[#allocation6 + $0x1c8] sm:$0xff]
        %v2181 = vld [vmem:[#allocation6 + $0x1d0] sm:$0xff]
        %v2182 = vld [vmem:[#allocation6 + $0x1d8] sm:$0xff]
        %v2183 = vld [vmem:[#allocation6 + $0x1e0] sm:$0xff]
        %v2184 = vld [vmem:[#allocation6 + $0x1e8] sm:$0xff]
        %v2185 = vld [vmem:[#allocation6 + $0x1f0] sm:$0xff]
        %v2186 = vld [vmem:[#allocation6 + $0x1f8] sm:$0xff]
        %v2187 = vld [vmem:[#allocation6 + $0x200] sm:$0xff]
        %v2188 = vld [vmem:[#allocation6 + $0x208] sm:$0xff]
        %v2189 = vld [vmem:[#allocation6 + $0x210] sm:$0xff]
        %v2190 = vld [vmem:[#allocation6 + $0x218] sm:$0xff]
        %v2191 = vld [vmem:[#allocation6 + $0x220] sm:$0xff]
        %v2192 = vld [vmem:[#allocation6 + $0x228] sm:$0xff]
        %v2193 = vld [vmem:[#allocation6 + $0x230] sm:$0xff]
        %v2194 = vld [vmem:[#allocation6 + $0x238] sm:$0xff]
        %v2195 = vld [vmem:[#allocation6 + $0x240] sm:$0xff]
        %v2196 = vld [vmem:[#allocation6 + $0x248] sm:$0xff]
        %v2197 = vld [vmem:[#allocation6 + $0x250] sm:$0xff]
        %v2198 = vld [vmem:[#allocation6 + $0x258] sm:$0xff]
        %v2199 = vld [vmem:[#allocation6 + $0x260] sm:$0xff]
        %v2200 = vld [vmem:[#allocation6 + $0x268] sm:$0xff]
        %v2201 = vld [vmem:[#allocation6 + $0x270] sm:$0xff]
        %v2202 = vld [vmem:[#allocation6 + $0x278] sm:$0xff]
        %v2203 = vld [vmem:[#allocation6 + $0x280] sm:$0xff]
        %v2204 = vld [vmem:[#allocation6 + $0x288] sm:$0xff]
        %v2205 = vld [vmem:[#allocation6 + $0x290] sm:$0xff]
        %v2206 = vld [vmem:[#allocation6 + $0x298] sm:$0xff]
        %v2207 = vld [vmem:[#allocation6 + $0x2a0] sm:$0xff]
        %v2208 = vld [vmem:[#allocation6 + $0x2a8] sm:$0xff]
        %v2209 = vld [vmem:[#allocation6 + $0x2b0] sm:$0xff]
        %v2210 = vld [vmem:[#allocation6 + $0x2b8] sm:$0xff]
        %v2211 = vld [vmem:[#allocation6 + $0x2c0] sm:$0xff]
        %v2212 = vld [vmem:[#allocation6 + $0x2c8] sm:$0xff]
        %v2213 = vld [vmem:[#allocation6 + $0x2d0] sm:$0xff]
        %v2214 = vld [vmem:[#allocation6 + $0x2d8] sm:$0xff]
        %v2215 = vld [vmem:[#allocation6 + $0x2e0] sm:$0xff]
        %v2216 = vld [vmem:[#allocation6 + $0x2e8] sm:$0xff]
        %v2217 = vld [vmem:[#allocation6 + $0x2f0] sm:$0xff]
        %v2218 = vld [vmem:[#allocation6 + $0x2f8] sm:$0xff]
        %v2219 = vld [vmem:[#allocation6 + $0x300] sm:$0xff]
        %v2220 = vld [vmem:[#allocation6 + $0x308] sm:$0xff]
        %v2221 = vld [vmem:[#allocation6 + $0x310] sm:$0xff]
        %v2222 = vld [vmem:[#allocation6 + $0x318] sm:$0xff]
        %v2223 = vld [vmem:[#allocation6 + $0x320] sm:$0xff]
        %v2224 = vld [vmem:[#allocation6 + $0x328] sm:$0xff]
        %v2225 = vld [vmem:[#allocation6 + $0x330] sm:$0xff]
        %v2226 = vld [vmem:[#allocation6 + $0x338] sm:$0xff]
        %v2227 = vld [vmem:[#allocation6 + $0x340] sm:$0xff]
        %v2228 = vld [vmem:[#allocation6 + $0x348] sm:$0xff]
        %v2229 = vld [vmem:[#allocation6 + $0x350] sm:$0xff]
        %v2230 = vld [vmem:[#allocation6 + $0x358] sm:$0xff]
        %v2231 = vld [vmem:[#allocation6 + $0x360] sm:$0xff]
        %v2232 = vld [vmem:[#allocation6 + $0x368] sm:$0xff]
        %v2233 = vld [vmem:[#allocation6 + $0x370] sm:$0xff]
        %v2234 = vld [vmem:[#allocation6 + $0x378] sm:$0xff]
        %v2235 = vld [vmem:[#allocation6 + $0x380] sm:$0xff]
        %v2236 = vld [vmem:[#allocation6 + $0x388] sm:$0xff]
        %v2237 = vld [vmem:[#allocation6 + $0x390] sm:$0xff]
        %v2238 = vld [vmem:[#allocation6 + $0x398] sm:$0xff]
        %v2239 = vld [vmem:[#allocation6 + $0x3a0] sm:$0xff]
        %v2240 = vld [vmem:[#allocation6 + $0x3a8] sm:$0xff]
        %v2241 = vld [vmem:[#allocation6 + $0x3b0] sm:$0xff]
        %v2242 = vld [vmem:[#allocation6 + $0x3b8] sm:$0xff]
        %v2243 = vld [vmem:[#allocation6 + $0x3c0] sm:$0xff]
        %v2244 = vld [vmem:[#allocation6 + $0x3c8] sm:$0xff]
        %v2245 = vld [vmem:[#allocation6 + $0x3d0] sm:$0xff]
        %v2246 = vld [vmem:[#allocation6 + $0x3d8] sm:$0xff]
        %v2247 = vld [vmem:[#allocation6 + $0x3e0] sm:$0xff]
        %v2248 = vld [vmem:[#allocation6 + $0x3e8] sm:$0xff]
        %v2249 = vld [vmem:[#allocation6 + $0x3f0] sm:$0xff]
        %v2250 = vld [vmem:[#allocation6 + $0x3f8] sm:$0xff]
        %v2251 = vld [vmem:[#allocation6 + $0x400] sm:$0xff]
        %v2252 = vld [vmem:[#allocation6 + $0x408] sm:$0xff]
        %v2253 = vld [vmem:[#allocation6 + $0x410] sm:$0xff]
        %v2254 = vld [vmem:[#allocation6 + $0x418] sm:$0xff]
        %v2255 = vld [vmem:[#allocation6 + $0x420] sm:$0xff]
        %v2256 = vld [vmem:[#allocation6 + $0x428] sm:$0xff]
        %v2257 = vld [vmem:[#allocation6 + $0x430] sm:$0xff]
        %v2258 = vld [vmem:[#allocation6 + $0x438] sm:$0xff]
        %v2259 = vld [vmem:[#allocation6 + $0x440] sm:$0xff]
        %v2260 = vld [vmem:[#allocation6 + $0x448] sm:$0xff]
        %v2261 = vld [vmem:[#allocation6 + $0x450] sm:$0xff]
        %v2262 = vld [vmem:[#allocation6 + $0x458] sm:$0xff]
        %v2263 = vld [vmem:[#allocation6 + $0x460] sm:$0xff]
        %v2264 = vld [vmem:[#allocation6 + $0x468] sm:$0xff]
        %v2265 = vld [vmem:[#allocation6 + $0x470] sm:$0xff]
        %v2266 = vld [vmem:[#allocation6 + $0x478] sm:$0xff]
        %2267 = vmatprep.subr.mxu0 0.0
        %2268 = vmatpush1.msra.mxu0 %v2123
        %2269 = vmatprep.subr.mxu0 0.0
        %2270 = vmatpush1.msra.mxu0 %v2124
        %2271 = vmatprep.subr.mxu0 0.0
        %2272 = vmatpush1.msra.mxu0 %v2125
        %2273 = vmatprep.subr.mxu0 0.0
        %2274 = vmatpush1.msra.mxu0 %v2126
        %2275 = vmatprep.subr.mxu0 0.0
        %2276 = vmatpush1.msra.mxu0 %v2127
        %2277 = vmatprep.subr.mxu0 0.0
        %2278 = vmatpush1.msra.mxu0 %v2128
        %2279 = vmatprep.subr.mxu0 0.0
        %2280 = vmatpush1.msra.mxu0 %v2129
        %2281 = vmatprep.subr.mxu0 0.0
        %2282 = vmatpush1.msra.mxu0 %v2130
        %2283 = vmatprep.subr.mxu0 0.0
        %2284 = vmatpush1.msra.mxu0 %v2131
        %2285 = vmatprep.subr.mxu0 0.0
        %2286 = vmatpush1.msra.mxu0 %v2132
        %2287 = vmatprep.subr.mxu0 0.0
        %2288 = vmatpush1.msra.mxu0 %v2133
        %2289 = vmatprep.subr.mxu0 0.0
        %2290 = vmatpush1.msra.mxu0 %v2134
        %2291 = vmatprep.subr.mxu0 0.0
        %2292 = vmatpush1.msra.mxu0 %v2135
        %2293 = vmatprep.subr.mxu0 0.0
        %2294 = vmatpush1.msra.mxu0 %v2136
        %2295 = vmatprep.subr.mxu0 0.0
        %2296 = vmatpush1.msra.mxu0 %v2137
        %2297 = vmatprep.subr.mxu0 0.0
        %2298 = vmatpush1.msra.mxu0 %v2138
        %2299 = vmatprep.subr.mxu0 0.0
        %2300 = vmatpush1.msra.mxu0 %v2139
        %2301 = vmatprep.subr.mxu0 0.0
        %2302 = vmatpush1.msra.mxu0 %v2140
        %2303 = vmatprep.subr.mxu0 0.0
        %2304 = vmatpush1.msra.mxu0 %v2141
        %2305 = vmatprep.subr.mxu0 0.0
        %2306 = vmatpush1.msra.mxu0 %v2142
        %2307 = vmatprep.subr.mxu0 0.0
        %2308 = vmatpush1.msra.mxu0 %v2143
        %2309 = vmatprep.subr.mxu0 0.0
        %2310 = vmatpush1.msra.mxu0 %v2144
        %2311 = vmatprep.subr.mxu0 0.0
        %2312 = vmatpush1.msra.mxu0 %v2145
        %2313 = vmatprep.subr.mxu0 0.0
        %2314 = vmatpush1.msra.mxu0 %v2146
        %2315 = vmatprep.subr.mxu0 0.0
        %2316 = vmatpush1.msra.mxu0 %v2147
        %2317 = vmatprep.subr.mxu0 0.0
        %2318 = vmatpush1.msra.mxu0 %v2148
        %2319 = vmatprep.subr.mxu0 0.0
        %2320 = vmatpush1.msra.mxu0 %v2149
        %2321 = vmatprep.subr.mxu0 0.0
        %2322 = vmatpush1.msra.mxu0 %v2150
        %2323 = vmatprep.subr.mxu0 0.0
        %2324 = vmatpush1.msra.mxu0 %v2151
        %2325 = vmatprep.subr.mxu0 0.0
        %2326 = vmatpush1.msra.mxu0 %v2152
        %2327 = vmatprep.subr.mxu0 0.0
        %2328 = vmatpush1.msra.mxu0 %v2153
        %2329 = vmatprep.subr.mxu0 0.0
        %2330 = vmatpush1.msra.mxu0 %v2154
        %2331 = vmatprep.mubr.f32.mxu0 %v2040
        %2332 = vmatmul.mubr.f32.gmra.mrb[0].mxu0 %v2001
        %v2333 = vpop.f32.mrb[0].mxu0
        %v2334 = vadd.f32 0.0, %v2333
        %v2335 = vpop.f32.mrb[0].mxu0
        %2336 = vmatprep.mubr.f32.mxu0 %v2043
        %2337 = vmatmul.mubr.f32.gmra.mrb[0].mxu0 %v2003
        %v2338 = vpop.f32.mrb[0].mxu0
        %v2339 = vadd.f32 0.0, %v2338
        %v2340 = vpop.f32.mrb[0].mxu0
        %2341 = vmatprep.mubr.f32.mxu0 %v2046
        %2342 = vmatmul.mubr.f32.gmra.mrb[0].mxu0 %v2005
        %v2343 = vpop.f32.mrb[0].mxu0
        %v2344 = vadd.f32 0.0, %v2343
        %v2345 = vpop.f32.mrb[0].mxu0
        %2346 = vmatprep.mubr.f32.mxu0 %v2049
        %2347 = vmatmul.mubr.f32.gmra.mrb[0].mxu0 %v2007
        %v2348 = vpop.f32.mrb[0].mxu0
        %v2349 = vadd.f32 0.0, %v2348
        %v2350 = vpop.f32.mrb[0].mxu0
        %2351 = vmatprep.mubr.f32.mxu0 %v2052
        %2352 = vmatmul.mubr.f32.gmra.mrb[0].mxu0 %v2009
        %v2353 = vpop.f32.mrb[0].mxu0
        %v2354 = vadd.f32 0.0, %v2353
        %v2355 = vpop.f32.mrb[0].mxu0
        %2356 = vmatprep.mubr.f32.mxu0 %v2055
        %2357 = vmatmul.mubr.f32.gmra.mrb[0].mxu0 %v2011
        %v2358 = vpop.f32.mrb[0].mxu0
        %v2359 = vadd.f32 0.0, %v2358
        %v2360 = vpop.f32.mrb[0].mxu0
        %2361 = vmatprep.mubr.f32.mxu0 %v2058
        %2362 = vmatmul.mubr.f32.gmra.mrb[0].mxu0 %v2013
        %v2363 = vpop.f32.mrb[0].mxu0
        %v2364 = vadd.f32 0.0, %v2363
        %v2365 = vpop.f32.mrb[0].mxu0
        %2366 = vmatprep.mubr.f32.mxu0 %v2061
        %2367 = vmatmul.mubr.f32.gmra.mrb[0].mxu0 %v2015
        %v2368 = vpop.f32.mrb[0].mxu0
        %v2369 = vadd.f32 0.0, %v2368
        %v2370 = vpop.f32.mrb[0].mxu0
        %2371 = vdwg.mxu0
        %2372 = vmatprep.subr.mxu0 0.0
        %2373 = vmatpush1.msra.mxu0 %v2155
        %2374 = vmatprep.subr.mxu0 0.0
        %2375 = vmatpush1.msra.mxu0 %v2156
        %2376 = vmatprep.subr.mxu0 0.0
        %2377 = vmatpush1.msra.mxu0 %v2157
        %2378 = vmatprep.subr.mxu0 0.0
        %2379 = vmatpush1.msra.mxu0 %v2158
        %2380 = vmatprep.subr.mxu0 0.0
        %2381 = vmatpush1.msra.mxu0 %v2159
        %2382 = vmatprep.subr.mxu0 0.0
        %2383 = vmatpush1.msra.mxu0 %v2160
        %2384 = vmatprep.subr.mxu0 0.0
        %2385 = vmatpush1.msra.mxu0 %v2161
        %2386 = vmatprep.subr.mxu0 0.0
        %2387 = vmatpush1.msra.mxu0 %v2162
        %2388 = vmatprep.subr.mxu0 0.0
        %2389 = vmatpush1.msra.mxu0 %v2163
        %2390 = vmatprep.subr.mxu0 0.0
        %2391 = vmatpush1.msra.mxu0 %v2164
        %2392 = vmatprep.subr.mxu0 0.0
        %2393 = vmatpush1.msra.mxu0 %v2165
        %2394 = vmatprep.subr.mxu0 0.0
        %2395 = vmatpush1.msra.mxu0 %v2166
        %2396 = vmatprep.subr.mxu0 0.0
        %2397 = vmatpush1.msra.mxu0 %v2167
        %2398 = vmatprep.subr.mxu0 0.0
        %2399 = vmatpush1.msra.mxu0 %v2168
        %2400 = vmatprep.subr.mxu0 0.0
        %2401 = vmatpush1.msra.mxu0 %v2169
        %2402 = vmatprep.subr.mxu0 0.0
        %2403 = vmatpush1.msra.mxu0 %v2170
        %2404 = vmatprep.subr.mxu0 0.0
        %2405 = vmatpush1.msra.mxu0 %v2171
        %2406 = vmatprep.subr.mxu0 0.0
        %2407 = vmatpush1.msra.mxu0 %v2172
        %2408 = vmatprep.subr.mxu0 0.0
        %2409 = vmatpush1.msra.mxu0 %v2173
        %2410 = vmatprep.subr.mxu0 0.0
        %2411 = vmatpush1.msra.mxu0 %v2174
        %2412 = vmatprep.subr.mxu0 0.0
        %2413 = vmatpush1.msra.mxu0 %v2175
        %2414 = vmatprep.subr.mxu0 0.0
        %2415 = vmatpush1.msra.mxu0 %v2176
        %2416 = vmatprep.subr.mxu0 0.0
        %2417 = vmatpush1.msra.mxu0 %v2177
        %2418 = vmatprep.subr.mxu0 0.0
        %2419 = vmatpush1.msra.mxu0 %v2178
        %2420 = vmatprep.subr.mxu0 0.0
        %2421 = vmatpush1.msra.mxu0 %v2179
        %2422 = vmatprep.subr.mxu0 0.0
        %2423 = vmatpush1.msra.mxu0 %v2180
        %2424 = vmatprep.subr.mxu0 0.0
        %2425 = vmatpush1.msra.mxu0 %v2181
        %2426 = vmatprep.subr.mxu0 0.0
        %2427 = vmatpush1.msra.mxu0 %v2182
        %2428 = vmatprep.subr.mxu0 0.0
        %2429 = vmatpush1.msra.mxu0 %v2183
        %2430 = vmatprep.subr.mxu0 0.0
        %2431 = vmatpush1.msra.mxu0 %v2184
        %2432 = vmatprep.subr.mxu0 0.0
        %2433 = vmatpush1.msra.mxu0 %v2185
        %2434 = vmatprep.subr.mxu0 0.0
        %2435 = vmatpush1.msra.mxu0 %v2186
        %2436 = vmatprep.mubr.f32.mxu0 %v2003
        %2437 = vmatmul.mubr.f32.gmra.mrb[0].mxu0 %v2073
        %v2438 = vpop.f32.mrb[0].mxu0
        %v2439 = vadd.f32 %v2334, %v2438
        %v2440 = vpop.f32.mrb[0].mxu0
        %2441 = vmatprep.mubr.f32.mxu0 %v2005
        %2442 = vmatmul.mubr.f32.gmra.mrb[0].mxu0 %v2076
        %v2443 = vpop.f32.mrb[0].mxu0
        %v2444 = vadd.f32 %v2339, %v2443
        %v2445 = vpop.f32.mrb[0].mxu0
        %2446 = vmatprep.mubr.f32.mxu0 %v2007
        %2447 = vmatmul.mubr.f32.gmra.mrb[0].mxu0 %v2079
        %v2448 = vpop.f32.mrb[0].mxu0
        %v2449 = vadd.f32 %v2344, %v2448
        %v2450 = vpop.f32.mrb[0].mxu0
        %2451 = vmatprep.mubr.f32.mxu0 %v2009
        %2452 = vmatmul.mubr.f32.gmra.mrb[0].mxu0 %v2082
        %v2453 = vpop.f32.mrb[0].mxu0
        %v2454 = vadd.f32 %v2349, %v2453
        %v2455 = vpop.f32.mrb[0].mxu0
        %2456 = vmatprep.mubr.f32.mxu0 %v2011
        %2457 = vmatmul.mubr.f32.gmra.mrb[0].mxu0 %v2085
        %v2458 = vpop.f32.mrb[0].mxu0
        %v2459 = vadd.f32 %v2354, %v2458
        %v2460 = vpop.f32.mrb[0].mxu0
        %2461 = vmatprep.mubr.f32.mxu0 %v2013
        %2462 = vmatmul.mubr.f32.gmra.mrb[0].mxu0 %v2088
        %v2463 = vpop.f32.mrb[0].mxu0
        %v2464 = vadd.f32 %v2359, %v2463
        %v2465 = vpop.f32.mrb[0].mxu0
        %2466 = vmatprep.mubr.f32.mxu0 %v2015
        %2467 = vmatmul.mubr.f32.gmra.mrb[0].mxu0 %v2091
        %v2468 = vpop.f32.mrb[0].mxu0
        %v2469 = vadd.f32 %v2364, %v2468
        %v2470 = vpop.f32.mrb[0].mxu0
        %2471 = vmatprep.mubr.f32.mxu0 %v2017
        %2472 = vmatmul.mubr.f32.gmra.mrb[0].mxu0 %v2094
        %v2473 = vpop.f32.mrb[0].mxu0
        %v2474 = vadd.f32 %v2369, %v2473
        %v2475 = vpop.f32.mrb[0].mxu0
        %2476 = vdwg.mxu0
        %2477 = vmatprep.subr.mxu0 0.0
        %2478 = vmatpush1.msra.mxu0 %v2187
        %2479 = vmatprep.subr.mxu0 0.0
        %2480 = vmatpush1.msra.mxu0 %v2188
        %2481 = vmatprep.subr.mxu0 0.0
        %2482 = vmatpush1.msra.mxu0 %v2189
        %2483 = vmatprep.subr.mxu0 0.0
        %2484 = vmatpush1.msra.mxu0 %v2190
        %2485 = vmatprep.subr.mxu0 0.0
        %2486 = vmatpush1.msra.mxu0 %v2191
        %2487 = vmatprep.subr.mxu0 0.0
        %2488 = vmatpush1.msra.mxu0 %v2192
        %2489 = vmatprep.subr.mxu0 0.0
        %2490 = vmatpush1.msra.mxu0 %v2193
        %2491 = vmatprep.subr.mxu0 0.0
        %2492 = vmatpush1.msra.mxu0 %v2194
        %2493 = vmatprep.subr.mxu0 0.0
        %2494 = vmatpush1.msra.mxu0 %v2195
        %2495 = vmatprep.subr.mxu0 0.0
        %2496 = vmatpush1.msra.mxu0 %v2196
        %2497 = vmatprep.subr.mxu0 0.0
        %2498 = vmatpush1.msra.mxu0 %v2197
        %2499 = vmatprep.subr.mxu0 0.0
        %2500 = vmatpush1.msra.mxu0 %v2198
        %2501 = vmatprep.subr.mxu0 0.0
        %2502 = vmatpush1.msra.mxu0 %v2199
        %2503 = vmatprep.subr.mxu0 0.0
        %2504 = vmatpush1.msra.mxu0 %v2200
        %2505 = vmatprep.subr.mxu0 0.0
        %2506 = vmatpush1.msra.mxu0 %v2201
        %2507 = vmatprep.subr.mxu0 0.0
        %2508 = vmatpush1.msra.mxu0 %v2202
        %2509 = vmatprep.subr.mxu0 0.0
        %2510 = vmatpush1.msra.mxu0 %v2203
        %2511 = vmatprep.subr.mxu0 0.0
        %2512 = vmatpush1.msra.mxu0 %v2204
        %2513 = vmatprep.subr.mxu0 0.0
        %2514 = vmatpush1.msra.mxu0 %v2205
        %2515 = vmatprep.subr.mxu0 0.0
        %2516 = vmatpush1.msra.mxu0 %v2206
        %2517 = vmatprep.subr.mxu0 0.0
        %2518 = vmatpush1.msra.mxu0 %v2207
        %2519 = vmatprep.subr.mxu0 0.0
        %2520 = vmatpush1.msra.mxu0 %v2208
        %2521 = vmatprep.subr.mxu0 0.0
        %2522 = vmatpush1.msra.mxu0 %v2209
        %2523 = vmatprep.subr.mxu0 0.0
        %2524 = vmatpush1.msra.mxu0 %v2210
        %2525 = vmatprep.subr.mxu0 0.0
        %2526 = vmatpush1.msra.mxu0 %v2211
        %2527 = vmatprep.subr.mxu0 0.0
        %2528 = vmatpush1.msra.mxu0 %v2212
        %2529 = vmatprep.subr.mxu0 0.0
        %2530 = vmatpush1.msra.mxu0 %v2213
        %2531 = vmatprep.subr.mxu0 0.0
        %2532 = vmatpush1.msra.mxu0 %v2214
        %2533 = vmatprep.subr.mxu0 0.0
        %2534 = vmatpush1.msra.mxu0 %v2215
        %2535 = vmatprep.subr.mxu0 0.0
        %2536 = vmatpush1.msra.mxu0 %v2216
        %2537 = vmatprep.subr.mxu0 0.0
        %2538 = vmatpush1.msra.mxu0 %v2217
        %2539 = vmatprep.subr.mxu0 0.0
        %2540 = vmatpush1.msra.mxu0 %v2218
        %2541 = vmatprep.mubr.f32.mxu0 %v2076
        %2542 = vmatmul.mubr.f32.gmra.mrb[0].mxu0 %v2043
        %v2543 = vpop.f32.mrb[0].mxu0
        %v2544 = vadd.f32 %v2439, %v2543
        %v2545 = vpop.f32.mrb[0].mxu0
        %2546 = vmatprep.mubr.f32.mxu0 %v2079
        %2547 = vmatmul.mubr.f32.gmra.mrb[0].mxu0 %v2046
        %v2548 = vpop.f32.mrb[0].mxu0
        %v2549 = vadd.f32 %v2444, %v2548
        %v2550 = vpop.f32.mrb[0].mxu0
        %2551 = vmatprep.mubr.f32.mxu0 %v2082
        %2552 = vmatmul.mubr.f32.gmra.mrb[0].mxu0 %v2049
        %v2553 = vpop.f32.mrb[0].mxu0
        %v2554 = vadd.f32 %v2449, %v2553
        %v2555 = vpop.f32.mrb[0].mxu0
        %2556 = vmatprep.mubr.f32.mxu0 %v2085
        %2557 = vmatmul.mubr.f32.gmra.mrb[0].mxu0 %v2052
        %v2558 = vpop.f32.mrb[0].mxu0
        %v2559 = vadd.f32 %v2454, %v2558
        %v2560 = vpop.f32.mrb[0].mxu0
        %2561 = vmatprep.mubr.f32.mxu0 %v2088
        %2562 = vmatmul.mubr.f32.gmra.mrb[0].mxu0 %v2055
        %v2563 = vpop.f32.mrb[0].mxu0
        %v2564 = vadd.f32 %v2459, %v2563
        %v2565 = vpop.f32.mrb[0].mxu0
        %2566 = vmatprep.mubr.f32.mxu0 %v2091
        %2567 = vmatmul.mubr.f32.gmra.mrb[0].mxu0 %v2058
        %v2568 = vpop.f32.mrb[0].mxu0
        %v2569 = vadd.f32 %v2464, %v2568
        %v2570 = vpop.f32.mrb[0].mxu0
        %2571 = vmatprep.mubr.f32.mxu0 %v2094
        %2572 = vmatmul.mubr.f32.gmra.mrb[0].mxu0 %v2061
        %v2573 = vpop.f32.mrb[0].mxu0
        %v2574 = vadd.f32 %v2469, %v2573
        %v2575 = vpop.f32.mrb[0].mxu0
        %2576 = vmatprep.mubr.f32.mxu0 %v2111
        %2577 = vmatmul.mubr.f32.gmra.mrb[0].mxu0 %v2107
        %v2578 = vpop.f32.mrb[0].mxu0
        %v2579 = vadd.f32 %v2474, %v2578
        %v2580 = vpop.f32.mrb[0].mxu0
        %2581 = vdwg.mxu0
        %2582 = vmatprep.subr.mxu0 0.0
        %2583 = vmatpush1.msra.mxu0 %v2219
        %2584 = vmatprep.subr.mxu0 0.0
        %2585 = vmatpush1.msra.mxu0 %v2220
        %2586 = vmatprep.subr.mxu0 0.0
        %2587 = vmatpush1.msra.mxu0 %v2221
        %2588 = vmatprep.subr.mxu0 0.0
        %2589 = vmatpush1.msra.mxu0 %v2222
        %2590 = vmatprep.subr.mxu0 0.0
        %2591 = vmatpush1.msra.mxu0 %v2223
        %2592 = vmatprep.subr.mxu0 0.0
        %2593 = vmatpush1.msra.mxu0 %v2224
        %2594 = vmatprep.subr.mxu0 0.0
        %2595 = vmatpush1.msra.mxu0 %v2225
        %2596 = vmatprep.subr.mxu0 0.0
        %2597 = vmatpush1.msra.mxu0 %v2226
        %2598 = vmatprep.subr.mxu0 0.0
        %2599 = vmatpush1.msra.mxu0 %v2227
        %2600 = vmatprep.subr.mxu0 0.0
        %2601 = vmatpush1.msra.mxu0 %v2228
        %2602 = vmatprep.subr.mxu0 0.0
        %2603 = vmatpush1.msra.mxu0 %v2229
        %2604 = vmatprep.subr.mxu0 0.0
        %2605 = vmatpush1.msra.mxu0 %v2230
        %2606 = vmatprep.subr.mxu0 0.0
        %2607 = vmatpush1.msra.mxu0 %v2231
        %2608 = vmatprep.subr.mxu0 0.0
        %2609 = vmatpush1.msra.mxu0 %v2232
        %2610 = vmatprep.subr.mxu0 0.0
        %2611 = vmatpush1.msra.mxu0 %v2233
        %2612 = vmatprep.subr.mxu0 0.0
        %2613 = vmatpush1.msra.mxu0 %v2234
        %2614 = vmatprep.subr.mxu0 0.0
        %2615 = vmatpush1.msra.mxu0 %v2235
        %2616 = vmatprep.subr.mxu0 0.0
        %2617 = vmatpush1.msra.mxu0 %v2236
        %2618 = vmatprep.subr.mxu0 0.0
        %2619 = vmatpush1.msra.mxu0 %v2237
        %2620 = vmatprep.subr.mxu0 0.0
        %2621 = vmatpush1.msra.mxu0 %v2238
        %2622 = vmatprep.subr.mxu0 0.0
        %2623 = vmatpush1.msra.mxu0 %v2239
        %2624 = vmatprep.subr.mxu0 0.0
        %2625 = vmatpush1.msra.mxu0 %v2240
        %2626 = vmatprep.subr.mxu0 0.0
        %2627 = vmatpush1.msra.mxu0 %v2241
        %2628 = vmatprep.subr.mxu0 0.0
        %2629 = vmatpush1.msra.mxu0 %v2242
        %2630 = vmatprep.subr.mxu0 0.0
        %2631 = vmatpush1.msra.mxu0 %v2243
        %2632 = vmatprep.subr.mxu0 0.0
        %2633 = vmatpush1.msra.mxu0 %v2244
        %2634 = vmatprep.subr.mxu0 0.0
        %2635 = vmatpush1.msra.mxu0 %v2245
        %2636 = vmatprep.subr.mxu0 0.0
        %2637 = vmatpush1.msra.mxu0 %v2246
        %2638 = vmatprep.subr.mxu0 0.0
        %2639 = vmatpush1.msra.mxu0 %v2247
        %2640 = vmatprep.subr.mxu0 0.0
        %2641 = vmatpush1.msra.mxu0 %v2248
        %2642 = vmatprep.subr.mxu0 0.0
        %2643 = vmatpush1.msra.mxu0 %v2249
        %2644 = vmatprep.subr.mxu0 0.0
        %2645 = vmatpush1.msra.mxu0 %v2250
        %2646 = vmatprep.mubr.f32.mxu0 %v2046
        %2647 = vmatmul.mubr.f32.gmra.mrb[0].mxu0 %v2005
        %v2648 = vpop.f32.mrb[0].mxu0
        %v2649 = vadd.f32 %v2544, %v2648
        %v2650 = vpop.f32.mrb[0].mxu0
        %2651 = vmatprep.mubr.f32.mxu0 %v2049
        %2652 = vmatmul.mubr.f32.gmra.mrb[0].mxu0 %v2007
        %v2653 = vpop.f32.mrb[0].mxu0
        %v2654 = vadd.f32 %v2549, %v2653
        %v2655 = vpop.f32.mrb[0].mxu0
        %2656 = vmatprep.mubr.f32.mxu0 %v2052
        %2657 = vmatmul.mubr.f32.gmra.mrb[0].mxu0 %v2009
        %v2658 = vpop.f32.mrb[0].mxu0
        %v2659 = vadd.f32 %v2554, %v2658
        %v2660 = vpop.f32.mrb[0].mxu0
        %2661 = vmatprep.mubr.f32.mxu0 %v2055
        %2662 = vmatmul.mubr.f32.gmra.mrb[0].mxu0 %v2011
        %v2663 = vpop.f32.mrb[0].mxu0
        %v2664 = vadd.f32 %v2559, %v2663
        %v2665 = vpop.f32.mrb[0].mxu0
        %2666 = vmatprep.mubr.f32.mxu0 %v2058
        %2667 = vmatmul.mubr.f32.gmra.mrb[0].mxu0 %v2013
        %v2668 = vpop.f32.mrb[0].mxu0
        %v2669 = vadd.f32 %v2564, %v2668
        %v2670 = vpop.f32.mrb[0].mxu0
        %2671 = vmatprep.mubr.f32.mxu0 %v2061
        %2672 = vmatmul.mubr.f32.gmra.mrb[0].mxu0 %v2015
        %v2673 = vpop.f32.mrb[0].mxu0
        %v2674 = vadd.f32 %v2569, %v2673
        %v2675 = vpop.f32.mrb[0].mxu0
        %2676 = vmatprep.mubr.f32.mxu0 %v2107
        %2677 = vmatmul.mubr.f32.gmra.mrb[0].mxu0 %v2017
        %v2678 = vpop.f32.mrb[0].mxu0
        %v2679 = vadd.f32 %v2574, %v2678
        %v2680 = vpop.f32.mrb[0].mxu0
        %2681 = vmatprep.mubr.f32.mxu0 %v2117
        %2682 = vmatmul.mubr.f32.gmra.mrb[0].mxu0 %v2019
        %v2683 = vpop.f32.mrb[0].mxu0
        %v2684 = vadd.f32 %v2579, %v2683
        %v2685 = vpop.f32.mrb[0].mxu0
        %2686 = vdwg.mxu0
        %2687 = vmatprep.subr.mxu0 0.0
        %2688 = vmatpush1.msra.mxu0 %v2251
        %2689 = vmatprep.subr.mxu0 0.0
        %2690 = vmatpush1.msra.mxu0 %v2252
        %2691 = vmatprep.subr.mxu0 0.0
        %2692 = vmatpush1.msra.mxu0 %v2253
        %2693 = vmatprep.subr.mxu0 0.0
        %2694 = vmatpush1.msra.mxu0 %v2254
        %2695 = vmatprep.subr.mxu0 0.0
        %2696 = vmatpush1.msra.mxu0 %v2255
        %2697 = vmatprep.subr.mxu0 0.0
        %2698 = vmatpush1.msra.mxu0 %v2256
        %2699 = vmatprep.subr.mxu0 0.0
        %2700 = vmatpush1.msra.mxu0 %v2257
        %2701 = vmatprep.subr.mxu0 0.0
        %2702 = vmatpush1.msra.mxu0 %v2258
        %2703 = vmatprep.subr.mxu0 0.0
        %2704 = vmatpush1.msra.mxu0 %v2259
        %2705 = vmatprep.subr.mxu0 0.0
        %2706 = vmatpush1.msra.mxu0 %v2260
        %2707 = vmatprep.subr.mxu0 0.0
        %2708 = vmatpush1.msra.mxu0 %v2261
        %2709 = vmatprep.subr.mxu0 0.0
        %2710 = vmatpush1.msra.mxu0 %v2262
        %2711 = vmatprep.subr.mxu0 0.0
        %2712 = vmatpush1.msra.mxu0 %v2263
        %2713 = vmatprep.subr.mxu0 0.0
        %2714 = vmatpush1.msra.mxu0 %v2264
        %2715 = vmatprep.subr.mxu0 0.0
        %2716 = vmatpush1.msra.mxu0 %v2265
        %2717 = vmatprep.subr.mxu0 0.0
        %2718 = vmatpush1.msra.mxu0 %v2266
        %2719 = vmatprep.subr.mxu0 0.0
        %2720 = vmatpush1.msra.mxu0 0.0
        %2721 = vmatprep.subr.mxu0 0.0
        %2722 = vmatpush1.msra.mxu0 0.0
        %2723 = vmatprep.subr.mxu0 0.0
        %2724 = vmatpush1.msra.mxu0 0.0
        %2725 = vmatprep.subr.mxu0 0.0
        %2726 = vmatpush1.msra.mxu0 0.0
        %2727 = vmatprep.subr.mxu0 0.0
        %2728 = vmatpush1.msra.mxu0 0.0
        %2729 = vmatprep.subr.mxu0 0.0
        %2730 = vmatpush1.msra.mxu0 0.0
        %2731 = vmatprep.subr.mxu0 0.0
        %2732 = vmatpush1.msra.mxu0 0.0
        %2733 = vmatprep.subr.mxu0 0.0
        %2734 = vmatpush1.msra.mxu0 0.0
        %2735 = vmatprep.subr.mxu0 0.0
        %2736 = vmatpush1.msra.mxu0 0.0
        %2737 = vmatprep.subr.mxu0 0.0
        %2738 = vmatpush1.msra.mxu0 0.0
        %2739 = vmatprep.subr.mxu0 0.0
        %2740 = vmatpush1.msra.mxu0 0.0
        %2741 = vmatprep.subr.mxu0 0.0
        %2742 = vmatpush1.msra.mxu0 0.0
        %2743 = vmatprep.subr.mxu0 0.0
        %2744 = vmatpush1.msra.mxu0 0.0
        %2745 = vmatprep.subr.mxu0 0.0
        %2746 = vmatpush1.msra.mxu0 0.0
        %2747 = vmatprep.subr.mxu0 0.0
        %2748 = vmatpush1.msra.mxu0 0.0
        %2749 = vmatprep.subr.mxu0 0.0
        %2750 = vmatpush1.msra.mxu0 0.0
        %2751 = vmatprep.mubr.f32.mxu0 0.0
        %2752 = vmatmul.mubr.f32.gmra.mrb[0].mxu0 %v2079
        %v2753 = vpop.f32.mrb[0].mxu0
        %v2754 = vadd.f32 %v2649, %v2753
        %v2755 = vpop.f32.mrb[0].mxu0
        %2756 = vmatprep.mubr.f32.mxu0 0.0
        %2757 = vmatmul.mubr.f32.gmra.mrb[0].mxu0 %v2082
        %v2758 = vpop.f32.mrb[0].mxu0
        %v2759 = vadd.f32 %v2654, %v2758
        %v2760 = vpop.f32.mrb[0].mxu0
        %2761 = vmatprep.mubr.f32.mxu0 0.0
        %2762 = vmatmul.mubr.f32.gmra.mrb[0].mxu0 %v2085
        %v2763 = vpop.f32.mrb[0].mxu0
        %v2764 = vadd.f32 %v2659, %v2763
        %v2765 = vpop.f32.mrb[0].mxu0
        %2766 = vmatprep.mubr.f32.mxu0 0.0
        %2767 = vmatmul.mubr.f32.gmra.mrb[0].mxu0 %v2088
        %v2768 = vpop.f32.mrb[0].mxu0
        %v2769 = vadd.f32 %v2664, %v2768
        %v2770 = vpop.f32.mrb[0].mxu0
        %2771 = vmatprep.mubr.f32.mxu0 0.0
        %2772 = vmatmul.mubr.f32.gmra.mrb[0].mxu0 %v2091
        %v2773 = vpop.f32.mrb[0].mxu0
        %v2774 = vadd.f32 %v2669, %v2773
        %v2775 = vpop.f32.mrb[0].mxu0
        %2776 = vmatprep.mubr.f32.mxu0 0.0
        %2777 = vmatmul.mubr.f32.gmra.mrb[0].mxu0 %v2094
        %v2778 = vpop.f32.mrb[0].mxu0
        %v2779 = vadd.f32 %v2674, %v2778
        %v2780 = vpop.f32.mrb[0].mxu0
        %2781 = vmatprep.mubr.f32.mxu0 0.0
        %2782 = vmatmul.mubr.f32.gmra.mrb[0].mxu0 %v2111
        %v2783 = vpop.f32.mrb[0].mxu0
        %v2784 = vadd.f32 %v2679, %v2783
        %v2785 = vpop.f32.mrb[0].mxu0
        %2786 = vmatprep.mubr.f32.mxu0 0.0
        %2787 = vmatmul.mubr.f32.gmra.mrb[0].mxu0 %v2121
        %v2788 = vpop.f32.mrb[0].mxu0
        %v2789 = vadd.f32 %v2684, %v2788
        %v2790 = vpop.f32.mrb[0].mxu0
        %2791 = vdwg.mxu0
        %2792 = vst [vmem:[%s261] sm:$0xff] %v2754
        %2793 = vst [vmem:[%s261 + $0x8] sm:$0xff] %v2759
        %2794 = vst [vmem:[%s261 + $0x10] sm:$0xff] %v2764
        %2795 = vst [vmem:[%s261 + $0x18] sm:$0xff] %v2769
        %2796 = vst [vmem:[%s261 + $0x20] sm:$0xff] %v2774
        %2797 = vst [vmem:[%s261 + $0x28] sm:$0xff] %v2779
        %2798 = vst [vmem:[%s261 + $0x30] sm:$0xff] %v2784
        %2799 = vst [vmem:[%s261 + $0x38] sm:$0xff] %v2789
        %v2800 = vadd.f32 %v2754, %v2759
        %v2801 = vadd.f32 %v2800, %v2764
        %v2802 = vadd.f32 %v2801, %v2769
        %v2803 = vadd.f32 %v2802, %v2774
        %v2804 = vadd.f32 %v2803, %v2779
        %v2805 = vadd.f32 %v2804, %v2784
        %v2806 = vadd.f32 %v2805, %v2789
        %v2807 = vrot.slane %v2806, 4
        %v2808 = vadd.f32 %v2806, %v2807
        %v2809 = vrot.slane %v2808, 2
        %v2810 = vadd.f32 %v2808, %v2809
        %v2811 = vrot.slane %v2810, 1
        %v2812 = vadd.f32 %v2810, %v2811
        %v2813 = vmul.f32 %v2754, %v2754
        %v2814 = vmul.f32 %v2759, %v2759
        %v2815 = vmul.f32 %v2764, %v2764
        %v2816 = vmul.f32 %v2769, %v2769
        %v2817 = vmul.f32 %v2774, %v2774
        %v2818 = vmul.f32 %v2779, %v2779
        %v2819 = vmul.f32 %v2784, %v2784
        %v2820 = vmul.f32 %v2789, %v2789
        %v2821 = vadd.f32 %v2813, %v2814
        %v2822 = vadd.f32 %v2821, %v2815
        %v2823 = vadd.f32 %v2822, %v2816
        %v2824 = vadd.f32 %v2823, %v2817
        %v2825 = vadd.f32 %v2824, %v2818
        %v2826 = vadd.f32 %v2825, %v2819
        %v2827 = vadd.f32 %v2826, %v2820
        %v2828 = vrot.slane %v2827, 4
        %v2829 = vadd.f32 %v2827, %v2828
        %v2830 = vrot.slane %v2829, 2
        %v2831 = vadd.f32 %v2829, %v2830
        %v2832 = vrot.slane %v2831, 1
        %v2833 = vadd.f32 %v2831, %v2832
        %v2834 = vlaneseq
        %v2835 = vshrl.u32 %v2834, 7
        %vm2836 = vcmp.eq.s32.totalorder %v2835, 0
        %vm2837 = vcmp.eq.s32.totalorder %v2835, 1
        %v2838 = vsel %vm2837, %v2833, 0.0
        %v2839 = vsel %vm2836, %v2812, %v2838
        %2840 = vst [vmem:[%s268] sm:$0xff] %v2839
        %s2841 = sand.u32 %s124, 1
        %s2842 = scalar_lea.sflag [#allocation5], %s2841
        %s2843 = sand.u32 %s124, 1
        %s2844 = smul.addr %s2843, 64
        %s2845 = scalar_lea.vmem [#allocation8], %s2844
        %s2846 = sand.u32 %s150, 1
        %s2847 = scalar_lea.sflag [#allocation10], %s2846
        %s2848 = sand.u32 %s150, 1
        %s2849 = smul.addr %s2848, 8
        %s2850 = scalar_lea.vmem [#allocation9], %s2849
        // Predicated region
        $region45: #{tpu_custom_call.1} parent=35 // pred_check
          %p2851 = pneg %p134
        $region46: #{tpu_custom_call.1} parent=35 // pred_check_branch
          %2853 = sbr.rel (%p2851) target = $region48
        $region47: #{tpu_custom_call.1} parent=35 // pred_region
          %s2855 = ssub.s32 1024, 1024
          %2856 = vsyncadd %s2842, %s2855
          %s2857 = smul.addr %s27, 8
          %s2858 = smul.addr %s2857, 128
          %s2859 = scalar_lea.hbm %s4, %s2858
          %s2860 = sshll.u32 %s2845, 4
          %s2861 = int_to_ptr.vmem [resolvable:$true] %s2860
          %2866 = dma.vmem_to_hbm [thread:$0]  %s2861, 1024, %s2859, %s2842, 128, 128, 8
        $region48: #{tpu_custom_call.1} parent=35 // pred_fallthru
          _
        // Predicated region
        $region49: #{tpu_custom_call.1} parent=35 // pred_check
          %p2867 = pneg %p160
        $region50: #{tpu_custom_call.1} parent=35 // pred_check_branch
          %2869 = sbr.rel (%p2867) target = $region52
        $region51: #{tpu_custom_call.1} parent=35 // pred_region
          %s2871 = ssub.s32 128, 128
          %2872 = vsyncadd %s2847, %s2871
          %s2873 = smul.addr %s27, 128
          %s2874 = scalar_lea.hbm %s5, %s2873
          %s2876 = sshll.u32 %s2850, 4
          %s2877 = int_to_ptr.vmem [resolvable:$true] %s2876
          %2879 = dma.vmem_to_hbm [thread:$0]  %s2877, 128, %s2874, %s2847
        $region52: #{tpu_custom_call.1} parent=35 // pred_fallthru
          _
      $region36: #{tpu_custom_call.1} parent=5 // pred_fallthru
        _
      %p2880 = scmp.le.s32.totalorder 2, %s22
      // Predicated region
      $region53: #{tpu_custom_call.1} parent=5 // pred_check
        %p2881 = pneg %p2880
      $region54: #{tpu_custom_call.1} parent=5 // pred_check_branch
        %2883 = sbr.rel (%p2881) target = $region56
      $region55: #{tpu_custom_call.1} parent=5 // pred_region
        %s2884 = ssub.s32 %s22, 2
        // Predicated region
        $region57: #{tpu_custom_call.1} parent=55 // pred_check
          %p2885 = pneg %p140
        $region58: #{tpu_custom_call.1} parent=55 // pred_check_branch
          %2887 = sbr.rel (%p2885) target = $region60
        $region59: #{tpu_custom_call.1} parent=55 // pred_region
          %s2888 = sand.u32 %s125, 1
          %s2889 = scalar_lea.sflag [#allocation5], %s2888
          %s2890 = sand.u32 %s125, 1
          %s2891 = smul.addr %s2890, 64
          %s2892 = scalar_lea.vmem [#allocation8], %s2891
          %2893 = dma.done %s2889, 1024
        $region60: #{tpu_custom_call.1} parent=55 // pred_fallthru
          _
        // Predicated region
        $region61: #{tpu_custom_call.1} parent=55 // pred_check
          %p2894 = pneg %p166
        $region62: #{tpu_custom_call.1} parent=55 // pred_check_branch
          %2896 = sbr.rel (%p2894) target = $region64
        $region63: #{tpu_custom_call.1} parent=55 // pred_region
          %s2897 = sand.u32 %s151, 1
          %s2898 = scalar_lea.sflag [#allocation10], %s2897
          %s2899 = sand.u32 %s151, 1
          %s2900 = smul.addr %s2899, 8
          %s2901 = scalar_lea.vmem [#allocation9], %s2900
          %2902 = dma.done %s2898, 128
        $region64: #{tpu_custom_call.1} parent=55 // pred_fallthru
          _
      $region56: #{tpu_custom_call.1} parent=5 // pred_fallthru
        _
    $region6: #{tpu_custom_call.1} parent=1 // loop_footer
      %s26 = sadd.s32 1, %s22
    $region7: #{tpu_custom_call.1} parent=1 // loop_footer_branch
      %21 = sbr.rel target = $region3
    $region8: #{tpu_custom_call.1} parent=1 // loop_exit
      _
    %2903 = vsyncpa [#allocation4], 1
    %s2904 = scalar_lea.sflag [#allocation4], 1
    %2905 = vsyncpa %s2904, 1
    %2906 = vsyncpa [#allocation7], 1
    %2907 = vsyncpa [#allocation5], 1
    %s2908 = scalar_lea.sflag [#allocation5], 1
    %2909 = vsyncpa %s2908, 1
    %2910 = vsyncpa [#allocation10], 1
    %s2911 = scalar_lea.sflag [#allocation10], 1
    %2912 = vsyncpa %s2911, 1

</llo_original>
